<compile_context>
chip_gen: v6e
topology: v6e:2x2x1
jax: 0.10.0
libtpu: 0.0.40
codegen_flags: <defaults>
</compile_context>

<pallas_src>
import jax
import jax.numpy as jnp
import numpy as np
from jax import lax
from jax.experimental import pallas as pl
from jax.experimental.pallas import tpu as pltpu

BN_EPS = 1e-5


def _make_kernel(B, N, tile_n, needs_mask):
    inv_count = 1.0 / float(B * N)

    def kernel(x_ref, w1_ref, g1_ref, be1_ref, w2t_ref, g2_ref, be2_ref,
               wfct_ref, bfc_ref, out_ref,
               sum1, sumsq1, scale1, shift1, sum2, sumsq2, mx2, mn2):
        phase = pl.program_id(0)
        b = pl.program_id(1)
        t = pl.program_id(2)
        nb = pl.num_programs(1)
        nt = pl.num_programs(2)

        # ---- init BN1 accumulators at the very first grid step ----
        @pl.when((phase == 0) & (b == 0) & (t == 0))
        def _():
            sum1[...] = jnp.zeros_like(sum1)
            sumsq1[...] = jnp.zeros_like(sumsq1)

        # x tile in native Conv1d NCL orientation: (Cin, tile_n), points on
        # lanes -> contiguous, lane-dense DMA straight from the NCL array.
        xt = x_ref[...].astype(jnp.float32)                       # (Cin, tile_n)

        # mlp1 1x1 conv on the MXU ((H,Cin)@(Cin,tile_n)), then ONE aligned
        # XLU transpose so points sit on sublanes / channels on lanes for all
        # downstream compute.  Conv bias omitted: BN mean subtraction
        # (training mode) cancels it exactly.
        h1 = jnp.dot(w1_ref[...], xt,
                     preferred_element_type=jnp.float32).T        # (tile_n, H)
        if needs_mask:
            row = t * tile_n + lax.broadcasted_iota(jnp.int32, (tile_n, 1), 0)
            valid = row < N                                        # (tile_n, 1)
            h1 = jnp.where(valid, h1, 0.0)

        # ---- phase 0: accumulate BN1 statistics over (batch, points) ----
        @pl.when(phase == 0)
        def _():
            sum1[...] += jnp.sum(h1, axis=0, keepdims=True)
            sumsq1[...] += jnp.sum(h1 * h1, axis=0, keepdims=True)

        # ---- phase 1: BN1+ReLU, raw h2, BN2 stats + running max/min ----
        @pl.when(phase == 1)
        def _():
            # Finalize BN1 scale/shift once; init phase-1 accumulators.
            @pl.when((b == 0) & (t == 0))
            def _():
                m1 = sum1[...] * inv_count
                v1 = jnp.maximum(sumsq1[...] * inv_count - m1 * m1, 0.0)
                s1 = g1_ref[...] * lax.rsqrt(v1 + BN_EPS)
                scale1[...] = s1
                shift1[...] = be1_ref[...] - m1 * s1
                sum2[...] = jnp.zeros_like(sum2)
                sumsq2[...] = jnp.zeros_like(sumsq2)
                mx2[...] = jnp.full_like(mx2, -jnp.inf)
                mn2[...] = jnp.full_like(mn2, jnp.inf)

            h1n = jnp.maximum(h1 * scale1[...] + shift1[...], 0.0)
            if needs_mask:
                h1n = jnp.where(valid, h1n, 0.0)   # keep BN2 sums exact
            h2 = jnp.dot(h1n, w2t_ref[...],
                         preferred_element_type=jnp.float32)      # (tile_n, F)

            sum2[...] += jnp.sum(h2, axis=0, keepdims=True)
            sumsq2[...] += jnp.sum(h2 * h2, axis=0, keepdims=True)

            h2_hi = h2 if not needs_mask else jnp.where(valid, h2, -jnp.inf)
            h2_lo = h2 if not needs_mask else jnp.where(valid, h2, jnp.inf)
            tile_max = jnp.max(h2_hi, axis=0, keepdims=True)       # (1, F)
            tile_min = jnp.min(h2_lo, axis=0, keepdims=True)       # (1, F)
            this_b = lax.broadcasted_iota(jnp.int32, (B, 1), 0) == b
            mx2[...] = jnp.where(this_b, jnp.maximum(mx2[...], tile_max), mx2[...])
            mn2[...] = jnp.where(this_b, jnp.minimum(mn2[...], tile_min), mn2[...])

            # ---- finalize on the last grid step: BN2 + ReLU on pooled, FC ----
            @pl.when((b == nb - 1) & (t == nt - 1))
            def _():
                m2 = sum2[...] * inv_count
                v2 = jnp.maximum(sumsq2[...] * inv_count - m2 * m2, 0.0)
                s2 = g2_ref[...] * lax.rsqrt(v2 + BN_EPS)
                sh2 = be2_ref[...] - m2 * s2
                # max-pool commuted past the monotone BN2 affine + ReLU;
                # the min accumulator handles negative per-channel scale.
                pooled_raw = jnp.where(s2 >= 0.0, mx2[...], mn2[...])   # (B, F)
                pooled = jnp.maximum(pooled_raw * s2 + sh2, 0.0)
                y = jnp.dot(pooled, wfct_ref[...],
                            preferred_element_type=jnp.float32) + bfc_ref[...]
                out_ref[...] = y.astype(out_ref.dtype)

    return kernel


def pointnetpp_forward(x_ncl, params, *, tile_n=None, interpret=False):
    """x_ncl: (B, input_dim, N) in PyTorch NCL layout (consumed natively)."""
    B, Cin, N = x_ncl.shape
    H = params['w1'].shape[0]           # 64
    F = params['wfc'].shape[0]          # feature_dim

    if tile_n is None:
        # Points map to the lane axis: one full-dim tile for modest N,
        # 512-point tiles (multiple of 128) when streaming large clouds.
        tile_n = N if N <= 1024 else 512
    tile_n = min(tile_n, N)
    if tile_n != N and tile_n % 128 != 0:
        raise ValueError("tile_n must equal N or be a multiple of 128 "
                         "(the point axis maps to TPU lanes).")
    num_tiles = pl.cdiv(N, tile_n)
    needs_mask = (N % tile_n) != 0

    # x stays in its native NCL layout: no wrapper transpose / extra HBM pass.
    x = jnp.asarray(x_ncl, jnp.float32)                         # (B, Cin, N)

    w1 = jnp.asarray(params['w1'], jnp.float32)                 # (H, Cin) natural
    w2t = jnp.asarray(params['w2'], jnp.float32).T              # (H, F)
    wfct = jnp.asarray(params['wfc'], jnp.float32).T            # (F, F)
    g1 = jnp.asarray(params['g1'], jnp.float32).reshape(1, H)
    be1 = jnp.asarray(params['be1'], jnp.float32).reshape(1, H)
    g2 = jnp.asarray(params['g2'], jnp.float32).reshape(1, F)
    be2 = jnp.asarray(params['be2'], jnp.float32).reshape(1, F)
    bfc = jnp.asarray(params['bfc'], jnp.float32).reshape(1, F)
    # Conv1d biases b1/b2 intentionally not passed: BN mean subtraction
    # (training mode) cancels them exactly.

    kernel = _make_kernel(B, N, tile_n, needs_mask)
    const = lambda *_: (0, 0)

    grid_spec = pltpu.PrefetchScalarGridSpec(
        num_scalar_prefetch=0,
        grid=(2, B, num_tiles),                 # (phase, batch, point-tile)
        in_specs=[
            pl.BlockSpec((None, Cin, tile_n), lambda p, b, t: (b, 0, t)),  # x (NCL)
            pl.BlockSpec((H, Cin), const),      # w1 (natural layout)
            pl.BlockSpec((1, H), const),        # gamma1
            pl.BlockSpec((1, H), const),        # beta1
            pl.BlockSpec((H, F), const),        # w2t
            pl.BlockSpec((1, F), const),        # gamma2
            pl.BlockSpec((1, F), const),        # beta2
            pl.BlockSpec((F, F), const),        # wfc (pre-transposed)
            pl.BlockSpec((1, F), const),        # bfc
        ],
        out_specs=pl.BlockSpec((B, F), const),
        scratch_shapes=[
            pltpu.VMEM((1, H), jnp.float32),    # sum1
            pltpu.VMEM((1, H), jnp.float32),    # sumsq1
            pltpu.VMEM((1, H), jnp.float32),    # BN1 scale (folded)
            pltpu.VMEM((1, H), jnp.float32),    # BN1 shift (folded)
            pltpu.VMEM((1, F), jnp.float32),    # sum2
            pltpu.VMEM((1, F), jnp.float32),    # sumsq2
            pltpu.VMEM((B, F), jnp.float32),    # running max of raw h2
            pltpu.VMEM((B, F), jnp.float32),    # running min (negative-gamma path)
        ],
    )
    return pl.pallas_call(
        kernel,
        out_shape=jax.ShapeDtypeStruct((B, F), jnp.float32),
        grid_spec=grid_spec,
        compiler_params=pltpu.CompilerParams(
            # BN statistics are a global reduction over (batch, points) into
            # shared scratch, so no grid axis can be split across cores.
            dimension_semantics=("arbitrary", "arbitrary", "arbitrary")),
        interpret=interpret,
    )(x, w1, g1, be1, w2t, g2, be2, wfct, bfc)


def make_params(key, input_dim, feature_dim):
    k1, k2, k3, k4, k5, k6 = jax.random.split(key, 6)
    hidden = 64
    return {
        # Conv1d(input_dim, 64, 1): weight (64, input_dim, 1) -> squeezed
        'w1': jax.random.normal(k1, (hidden, input_dim), jnp.float32) * 0.1,
        'b1': jax.random.normal(k2, (hidden,), jnp.float32) * 0.1,
        'g1': jnp.ones((hidden,), jnp.float32),      # BN1 default weight
        'be1': jnp.zeros((hidden,), jnp.float32),    # BN1 default bias
        # Conv1d(64, feature_dim, 1)
        'w2': jax.random.normal(k3, (feature_dim, hidden), jnp.float32) * 0.1,
        'b2': jax.random.normal(k4, (feature_dim,), jnp.float32) * 0.1,
        'g2': jnp.ones((feature_dim,), jnp.float32),
        'be2': jnp.zeros((feature_dim,), jnp.float32),
        # Linear(feature_dim, feature_dim)
        'wfc': jax.random.normal(k5, (feature_dim, feature_dim), jnp.float32) * 0.1,
        'bfc': jax.random.normal(k6, (feature_dim,), jnp.float32) * 0.1,
    }


def reference_forward(x_ncl, p):
    """Pure-JAX reference replicating the PyTorch forward (training-mode BN)."""
    x = jnp.transpose(x_ncl, (0, 2, 1))                       # (B, N, Cin)
    h1 = jnp.einsum('bnc,oc->bno', x, p['w1']) + p['b1']
    m1 = jnp.mean(h1, axis=(0, 1), keepdims=True)
    v1 = jnp.mean((h1 - m1) ** 2, axis=(0, 1), keepdims=True)
    h1 = jnp.maximum(p['g1'] * (h1 - m1) / jnp.sqrt(v1 + BN_EPS) + p['be1'], 0.0)
    h2 = jnp.einsum('bnc,oc->bno', h1, p['w2']) + p['b2']
    m2 = jnp.mean(h2, axis=(0, 1), keepdims=True)
    v2 = jnp.mean((h2 - m2) ** 2, axis=(0, 1), keepdims=True)
    h2 = jnp.maximum(p['g2'] * (h2 - m2) / jnp.sqrt(v2 + BN_EPS) + p['be2'], 0.0)
    pooled = jnp.max(h2, axis=1)
    return pooled @ p['wfc'].T + p['bfc']


if __name__ == "__main__":
    key = jax.random.PRNGKey(0)
    kx, kp = jax.random.split(key)

    B, input_dim, N, feature_dim = 2, 4, 256, 128
    x = jax.random.normal(kx, (B, input_dim, N), jnp.float32)  # PyTorch NCL layout
    params = make_params(kp, input_dim, feature_dim)

    # tile_n=128 (one lane-tile) exercises the multi-tile streaming /
    # accumulator path even at this small N (production default streams
    # 512-point tiles for large clouds).
    out = pointnetpp_forward(x, params, tile_n=128)
    out = jax.block_until_ready(out)

    ref = jax.block_until_ready(reference_forward(x, params))
    assert out.shape == (B, feature_dim)
    np.testing.assert_allclose(np.asarray(out), np.asarray(ref), rtol=1e-4, atol=1e-4)

    print("KERNEL_OK")
</pallas_src>

<mosaic_0001>
module attributes {stable_mosaic.version = 11 : i64} {
  func.func @kernel(%arg0: i32, %arg1: i32, %arg2: i32, %arg3: memref<1x4x128xf32, #tpu.memory_space<vmem>>, %arg4: memref<64x4xf32, #tpu.memory_space<vmem>>, %arg5: memref<1x64xf32, #tpu.memory_space<vmem>>, %arg6: memref<1x64xf32, #tpu.memory_space<vmem>>, %arg7: memref<64x128xf32, #tpu.memory_space<vmem>>, %arg8: memref<1x128xf32, #tpu.memory_space<vmem>>, %arg9: memref<1x128xf32, #tpu.memory_space<vmem>>, %arg10: memref<128x128xf32, #tpu.memory_space<vmem>>, %arg11: memref<1x128xf32, #tpu.memory_space<vmem>>, %arg12: memref<2x128xf32, #tpu.memory_space<vmem>>, %arg13: memref<1x64xf32, #tpu.memory_space<vmem>>, %arg14: memref<1x64xf32, #tpu.memory_space<vmem>>, %arg15: memref<1x64xf32, #tpu.memory_space<vmem>>, %arg16: memref<1x64xf32, #tpu.memory_space<vmem>>, %arg17: memref<1x128xf32, #tpu.memory_space<vmem>>, %arg18: memref<1x128xf32, #tpu.memory_space<vmem>>, %arg19: memref<2x128xf32, #tpu.memory_space<vmem>>, %arg20: memref<2x128xf32, #tpu.memory_space<vmem>>) attributes {dimension_semantics = [#tpu.dimension_semantics<arbitrary>, #tpu.dimension_semantics<arbitrary>, #tpu.dimension_semantics<arbitrary>], iteration_bounds = array<i64: 2, 2, 2>, scalar_prefetch = 0 : i64, scratch_operands = 8 : i64, tpu.core_type = #tpu.core_type<tc>, window_params = [{transform_indices = @transform_0, window_bounds = array<i64: 1, 4, 128>}, {pipeline_mode = #tpu.pipeline_mode<synchronous>, transform_indices = @transform_1, window_bounds = array<i64: 64, 4>}, {pipeline_mode = #tpu.pipeline_mode<synchronous>, transform_indices = @transform_2, window_bounds = array<i64: 1, 64>}, {pipeline_mode = #tpu.pipeline_mode<synchronous>, transform_indices = @transform_3, window_bounds = array<i64: 1, 64>}, {pipeline_mode = #tpu.pipeline_mode<synchronous>, transform_indices = @transform_4, window_bounds = array<i64: 64, 128>}, {pipeline_mode = #tpu.pipeline_mode<synchronous>, transform_indices = @transform_5, window_bounds = array<i64: 1, 128>}, {pipeline_mode = #tpu.pipeline_mode<synchronous>, transform_indices = @transform_6, window_bounds = array<i64: 1, 128>}, {pipeline_mode = #tpu.pipeline_mode<synchronous>, transform_indices = @transform_7, window_bounds = array<i64: 128, 128>}, {pipeline_mode = #tpu.pipeline_mode<synchronous>, transform_indices = @transform_8, window_bounds = array<i64: 1, 128>}, {pipeline_mode = #tpu.pipeline_mode<synchronous>, transform_indices = @transform_9, window_bounds = array<i64: 2, 128>}]} {
    %c0_i32 = arith.constant 0 : i32
    %0 = arith.cmpi eq, %arg0, %c0_i32 : i32
    %c0_i32_0 = arith.constant 0 : i32
    %1 = arith.cmpi eq, %arg1, %c0_i32_0 : i32
    %2 = arith.andi %0, %1 : i1
    %c0_i32_1 = arith.constant 0 : i32
    %3 = arith.cmpi eq, %arg2, %c0_i32_1 : i32
    %4 = arith.andi %2, %3 : i1
    %5 = arith.extui %4 : i1 to i32
    %c0_i32_2 = arith.constant 0 : i32
    %6 = arith.cmpi ne, %5, %c0_i32_2 : i32
    scf.if %6 {
      %cst_10 = arith.constant 0.000000e+00 : f32
      %18 = vector.broadcast %cst_10 : f32 to vector<1x64xf32>
      %c0_11 = arith.constant 0 : index
      %c0_12 = arith.constant 0 : index
      %19 = vector.load %arg13[%c0_11, %c0_12] : memref<1x64xf32, #tpu.memory_space<vmem>>, vector<1x64xf32>
      tpu.vector_store %arg13[%c0_11, %c0_12], %18 {strides = array<i32>} : memref<1x64xf32, #tpu.memory_space<vmem>>, vector<1x64xf32>,
      %cst_13 = arith.constant 0.000000e+00 : f32
      %20 = vector.broadcast %cst_13 : f32 to vector<1x64xf32>
      %c0_14 = arith.constant 0 : index
      %c0_15 = arith.constant 0 : index
      %21 = vector.load %arg14[%c0_14, %c0_15] : memref<1x64xf32, #tpu.memory_space<vmem>>, vector<1x64xf32>
      tpu.vector_store %arg14[%c0_14, %c0_15], %20 {strides = array<i32>} : memref<1x64xf32, #tpu.memory_space<vmem>>, vector<1x64xf32>,
    } else {
    }
    %c0 = arith.constant 0 : index
    %c0_3 = arith.constant 0 : index
    %c0_4 = arith.constant 0 : index
    %7 = vector.load %arg3[%c0, %c0_3, %c0_4] : memref<1x4x128xf32, #tpu.memory_space<vmem>>, vector<1x4x128xf32>
    %8 = vector.shape_cast %7 : vector<1x4x128xf32> to vector<4x128xf32>
    %c0_5 = arith.constant 0 : index
    %c0_6 = arith.constant 0 : index
    %9 = vector.load %arg4[%c0_5, %c0_6] : memref<64x4xf32, #tpu.memory_space<vmem>>, vector<64x4xf32>
    %cst = arith.constant dense<0.000000e+00> : vector<64x128xf32>
    %10 = tpu.matmul %9, %8, %cst {dimension_numbers = #tpu.dot_dimension_numbers<[1], [0], [0], [1], [0, 0, 1, 1], [], []>} : vector<64x4xf32>, vector<4x128xf32>, vector<64x128xf32> -> vector<64x128xf32>
    %11 = tpu.transpose %10, [1, 0] : vector<64x128xf32> -> vector<128x64xf32>
    %c0_i32_7 = arith.constant 0 : i32
    %12 = arith.cmpi eq, %arg0, %c0_i32_7 : i32
    %13 = arith.extui %12 : i1 to i32
    %c0_i32_8 = arith.constant 0 : i32
    %14 = arith.cmpi ne, %13, %c0_i32_8 : i32
    scf.if %14 {
      %c0_10 = arith.constant 0 : index
      %c0_11 = arith.constant 0 : index
      %18 = vector.load %arg13[%c0_10, %c0_11] : memref<1x64xf32, #tpu.memory_space<vmem>>, vector<1x64xf32>
      %cst_12 = arith.constant dense<0.000000e+00> : vector<64xf32>
      %19 = vector.multi_reduction <add>, %11, %cst_12 [0] : vector<128x64xf32> to vector<64xf32>
      %20 = vector.shape_cast %19 : vector<64xf32> to vector<1x64xf32>
      %21 = arith.addf %18, %20 : vector<1x64xf32>
      %c0_13 = arith.constant 0 : index
      %c0_14 = arith.constant 0 : index
      %22 = vector.load %arg13[%c0_13, %c0_14] : memref<1x64xf32, #tpu.memory_space<vmem>>, vector<1x64xf32>
      tpu.vector_store %arg13[%c0_13, %c0_14], %21 {strides = array<i32>} : memref<1x64xf32, #tpu.memory_space<vmem>>, vector<1x64xf32>,
      %c0_15 = arith.constant 0 : index
      %c0_16 = arith.constant 0 : index
      %23 = vector.load %arg14[%c0_15, %c0_16] : memref<1x64xf32, #tpu.memory_space<vmem>>, vector<1x64xf32>
      %24 = arith.mulf %11, %11 : vector<128x64xf32>
      %cst_17 = arith.constant dense<0.000000e+00> : vector<64xf32>
      %25 = vector.multi_reduction <add>, %24, %cst_17 [0] : vector<128x64xf32> to vector<64xf32>
      %26 = vector.shape_cast %25 : vector<64xf32> to vector<1x64xf32>
      %27 = arith.addf %23, %26 : vector<1x64xf32>
      %c0_18 = arith.constant 0 : index
      %c0_19 = arith.constant 0 : index
      %28 = vector.load %arg14[%c0_18, %c0_19] : memref<1x64xf32, #tpu.memory_space<vmem>>, vector<1x64xf32>
      tpu.vector_store %arg14[%c0_18, %c0_19], %27 {strides = array<i32>} : memref<1x64xf32, #tpu.memory_space<vmem>>, vector<1x64xf32>,
    } else {
    }
    %c1_i32 = arith.constant 1 : i32
    %15 = arith.cmpi eq, %arg0, %c1_i32 : i32
    %16 = arith.extui %15 : i1 to i32
    %c0_i32_9 = arith.constant 0 : i32
    %17 = arith.cmpi ne, %16, %c0_i32_9 : i32
    scf.if %17 {
      %c0_i32_10 = arith.constant 0 : i32
      %18 = arith.cmpi eq, %arg1, %c0_i32_10 : i32
      %c0_i32_11 = arith.constant 0 : i32
      %19 = arith.cmpi eq, %arg2, %c0_i32_11 : i32
      %20 = arith.andi %18, %19 : i1
      %21 = arith.extui %20 : i1 to i32
      %c0_i32_12 = arith.constant 0 : i32
      %22 = arith.cmpi ne, %21, %c0_i32_12 : i32
      scf.if %22 {
        %c0_48 = arith.constant 0 : index
        %c0_49 = arith.constant 0 : index
        %72 = vector.load %arg13[%c0_48, %c0_49] : memref<1x64xf32, #tpu.memory_space<vmem>>, vector<1x64xf32>
        %cst_50 = arith.constant 0.001953125 : f32
        %73 = vector.broadcast %cst_50 : f32 to vector<1x64xf32>
        %74 = arith.mulf %72, %73 : vector<1x64xf32>
        %c0_51 = arith.constant 0 : index
        %c0_52 = arith.constant 0 : index
        %75 = vector.load %arg14[%c0_51, %c0_52] : memref<1x64xf32, #tpu.memory_space<vmem>>, vector<1x64xf32>
        %cst_53 = arith.constant 0.001953125 : f32
        %76 = vector.broadcast %cst_53 : f32 to vector<1x64xf32>
        %77 = arith.mulf %75, %76 : vector<1x64xf32>
        %78 = arith.mulf %74, %74 : vector<1x64xf32>
        %79 = arith.subf %77, %78 : vector<1x64xf32>
        %cst_54 = arith.constant 0.000000e+00 : f32
        %80 = vector.broadcast %cst_54 : f32 to vector<1x64xf32>
        %81 = arith.maximumf %79, %80 : vector<1x64xf32>
        %c0_55 = arith.constant 0 : index
        %c0_56 = arith.constant 0 : index
        %82 = vector.load %arg5[%c0_55, %c0_56] : memref<1x64xf32, #tpu.memory_space<vmem>>, vector<1x64xf32>
        %cst_57 = arith.constant 9.99999974E-6 : f32
        %83 = vector.broadcast %cst_57 : f32 to vector<1x64xf32>
        %84 = arith.addf %81, %83 : vector<1x64xf32>
        %85 = math.rsqrt %84 : vector<1x64xf32>
        %86 = arith.mulf %82, %85 : vector<1x64xf32>
        %c0_58 = arith.constant 0 : index
        %c0_59 = arith.constant 0 : index
        %87 = vector.load %arg15[%c0_58, %c0_59] : memref<1x64xf32, #tpu.memory_space<vmem>>, vector<1x64xf32>
        tpu.vector_store %arg15[%c0_58, %c0_59], %86 {strides = array<i32>} : memref<1x64xf32, #tpu.memory_space<vmem>>, vector<1x64xf32>,
        %c0_60 = arith.constant 0 : index
        %c0_61 = arith.constant 0 : index
        %88 = vector.load %arg6[%c0_60, %c0_61] : memref<1x64xf32, #tpu.memory_space<vmem>>, vector<1x64xf32>
        %89 = arith.mulf %74, %86 : vector<1x64xf32>
        %90 = arith.subf %88, %89 : vector<1x64xf32>
        %c0_62 = arith.constant 0 : index
        %c0_63 = arith.constant 0 : index
        %91 = vector.load %arg16[%c0_62, %c0_63] : memref<1x64xf32, #tpu.memory_space<vmem>>, vector<1x64xf32>
        tpu.vector_store %arg16[%c0_62, %c0_63], %90 {strides = array<i32>} : memref<1x64xf32, #tpu.memory_space<vmem>>, vector<1x64xf32>,
        %cst_64 = arith.constant 0.000000e+00 : f32
        %92 = vector.broadcast %cst_64 : f32 to vector<1x128xf32>
        %c0_65 = arith.constant 0 : index
        %c0_66 = arith.constant 0 : index
        %93 = vector.load %arg17[%c0_65, %c0_66] : memref<1x128xf32, #tpu.memory_space<vmem>>, vector<1x128xf32>
        tpu.vector_store %arg17[%c0_65, %c0_66], %92 {strides = array<i32>} : memref<1x128xf32, #tpu.memory_space<vmem>>, vector<1x128xf32>,
        %cst_67 = arith.constant 0.000000e+00 : f32
        %94 = vector.broadcast %cst_67 : f32 to vector<1x128xf32>
        %c0_68 = arith.constant 0 : index
        %c0_69 = arith.constant 0 : index
        %95 = vector.load %arg18[%c0_68, %c0_69] : memref<1x128xf32, #tpu.memory_space<vmem>>, vector<1x128xf32>
        tpu.vector_store %arg18[%c0_68, %c0_69], %94 {strides = array<i32>} : memref<1x128xf32, #tpu.memory_space<vmem>>, vector<1x128xf32>,
        %cst_70 = arith.constant 0xFF800000 : f32
        %96 = vector.broadcast %cst_70 : f32 to vector<2x128xf32>
        %c0_71 = arith.constant 0 : index
        %c0_72 = arith.constant 0 : index
        %97 = vector.load %arg19[%c0_71, %c0_72] : memref<2x128xf32, #tpu.memory_space<vmem>>, vector<2x128xf32>
        tpu.vector_store %arg19[%c0_71, %c0_72], %96 {strides = array<i32>} : memref<2x128xf32, #tpu.memory_space<vmem>>, vector<2x128xf32>,
        %cst_73 = arith.constant 0x7F800000 : f32
        %98 = vector.broadcast %cst_73 : f32 to vector<2x128xf32>
        %c0_74 = arith.constant 0 : index
        %c0_75 = arith.constant 0 : index
        %99 = vector.load %arg20[%c0_74, %c0_75] : memref<2x128xf32, #tpu.memory_space<vmem>>, vector<2x128xf32>
        tpu.vector_store %arg20[%c0_74, %c0_75], %98 {strides = array<i32>} : memref<2x128xf32, #tpu.memory_space<vmem>>, vector<2x128xf32>,
      } else {
      }
      %c0_13 = arith.constant 0 : index
      %c0_14 = arith.constant 0 : index
      %23 = vector.load %arg15[%c0_13, %c0_14] : memref<1x64xf32, #tpu.memory_space<vmem>>, vector<1x64xf32>
      %24 = vector.broadcast %23 : vector<1x64xf32> to vector<128x64xf32>
      %25 = arith.mulf %11, %24 : vector<128x64xf32>
      %c0_15 = arith.constant 0 : index
      %c0_16 = arith.constant 0 : index
      %26 = vector.load %arg16[%c0_15, %c0_16] : memref<1x64xf32, #tpu.memory_space<vmem>>, vector<1x64xf32>
      %27 = vector.broadcast %26 : vector<1x64xf32> to vector<128x64xf32>
      %28 = arith.addf %25, %27 : vector<128x64xf32>
      %cst_17 = arith.constant 0.000000e+00 : f32
      %29 = vector.broadcast %cst_17 : f32 to vector<128x64xf32>
      %30 = arith.maximumf %28, %29 : vector<128x64xf32>
      %c0_18 = arith.constant 0 : index
      %c0_19 = arith.constant 0 : index
      %31 = vector.load %arg7[%c0_18, %c0_19] : memref<64x128xf32, #tpu.memory_space<vmem>>, vector<64x128xf32>
      %cst_20 = arith.constant dense<0.000000e+00> : vector<128x128xf32>
      %32 = tpu.matmul %30, %31, %cst_20 {dimension_numbers = #tpu.dot_dimension_numbers<[1], [0], [0], [1], [0, 0, 1, 1], [], []>} : vector<128x64xf32>, vector<64x128xf32>, vector<128x128xf32> -> vector<128x128xf32>
      %c0_21 = arith.constant 0 : index
      %c0_22 = arith.constant 0 : index
      %33 = vector.load %arg17[%c0_21, %c0_22] : memref<1x128xf32, #tpu.memory_space<vmem>>, vector<1x128xf32>
      %cst_23 = arith.constant dense<0.000000e+00> : vector<128xf32>
      %34 = vector.multi_reduction <add>, %32, %cst_23 [0] : vector<128x128xf32> to vector<128xf32>
      %35 = vector.shape_cast %34 : vector<128xf32> to vector<1x128xf32>
      %36 = arith.addf %33, %35 : vector<1x128xf32>
      %c0_24 = arith.constant 0 : index
      %c0_25 = arith.constant 0 : index
      %37 = vector.load %arg17[%c0_24, %c0_25] : memref<1x128xf32, #tpu.memory_space<vmem>>, vector<1x128xf32>
      tpu.vector_store %arg17[%c0_24, %c0_25], %36 {strides = array<i32>} : memref<1x128xf32, #tpu.memory_space<vmem>>, vector<1x128xf32>,
      %c0_26 = arith.constant 0 : index
      %c0_27 = arith.constant 0 : index
      %38 = vector.load %arg18[%c0_26, %c0_27] : memref<1x128xf32, #tpu.memory_space<vmem>>, vector<1x128xf32>
      %39 = arith.mulf %32, %32 : vector<128x128xf32>
      %cst_28 = arith.constant dense<0.000000e+00> : vector<128xf32>
      %40 = vector.multi_reduction <add>, %39, %cst_28 [0] : vector<128x128xf32> to vector<128xf32>
      %41 = vector.shape_cast %40 : vector<128xf32> to vector<1x128xf32>
      %42 = arith.addf %38, %41 : vector<1x128xf32>
      %c0_29 = arith.constant 0 : index
      %c0_30 = arith.constant 0 : index
      %43 = vector.load %arg18[%c0_29, %c0_30] : memref<1x128xf32, #tpu.memory_space<vmem>>, vector<1x128xf32>
      tpu.vector_store %arg18[%c0_29, %c0_30], %42 {strides = array<i32>} : memref<1x128xf32, #tpu.memory_space<vmem>>, vector<1x128xf32>,
      %cst_31 = arith.constant dense<0xFF800000> : vector<128xf32>
      %44 = vector.multi_reduction <maximumf>, %32, %cst_31 [0] : vector<128x128xf32> to vector<128xf32>
      %45 = vector.shape_cast %44 : vector<128xf32> to vector<1x128xf32>
      %cst_32 = arith.constant dense<0x7F800000> : vector<128xf32>
      %46 = vector.multi_reduction <minimumf>, %32, %cst_32 [0] : vector<128x128xf32> to vector<128xf32>
      %47 = vector.shape_cast %46 : vector<128xf32> to vector<1x128xf32>
      %48 = tpu.iota {dimensions = array<i32: 0>} : vector<2x1xi32>
      %49 = vector.broadcast %arg1 : i32 to vector<2x1xi32>
      %50 = arith.cmpi eq, %48, %49 : vector<2x1xi32>
      %c0_33 = arith.constant 0 : index
      %c0_34 = arith.constant 0 : index
      %51 = vector.load %arg19[%c0_33, %c0_34] : memref<2x128xf32, #tpu.memory_space<vmem>>, vector<2x128xf32>
      %52 = vector.broadcast %45 : vector<1x128xf32> to vector<2x128xf32>
      %53 = arith.maximumf %51, %52 : vector<2x128xf32>
      %c0_35 = arith.constant 0 : index
      %c0_36 = arith.constant 0 : index
      %54 = vector.load %arg19[%c0_35, %c0_36] : memref<2x128xf32, #tpu.memory_space<vmem>>, vector<2x128xf32>
      %55 = vector.shape_cast %50 : vector<2x1xi1> to vector<2x1xi1>
      %56 = vector.broadcast %55 : vector<2x1xi1> to vector<2x128xi1>
      %57 = arith.select %56, %53, %54 : vector<2x128xi1>, vector<2x128xf32>
      %c0_37 = arith.constant 0 : index
      %c0_38 = arith.constant 0 : index
      %58 = vector.load %arg19[%c0_37, %c0_38] : memref<2x128xf32, #tpu.memory_space<vmem>>, vector<2x128xf32>
      tpu.vector_store %arg19[%c0_37, %c0_38], %57 {strides = array<i32>} : memref<2x128xf32, #tpu.memory_space<vmem>>, vector<2x128xf32>,
      %c0_39 = arith.constant 0 : index
      %c0_40 = arith.constant 0 : index
      %59 = vector.load %arg20[%c0_39, %c0_40] : memref<2x128xf32, #tpu.memory_space<vmem>>, vector<2x128xf32>
      %60 = vector.broadcast %47 : vector<1x128xf32> to vector<2x128xf32>
      %61 = arith.minimumf %59, %60 : vector<2x128xf32>
      %c0_41 = arith.constant 0 : index
      %c0_42 = arith.constant 0 : index
      %62 = vector.load %arg20[%c0_41, %c0_42] : memref<2x128xf32, #tpu.memory_space<vmem>>, vector<2x128xf32>
      %63 = vector.shape_cast %50 : vector<2x1xi1> to vector<2x1xi1>
      %64 = vector.broadcast %63 : vector<2x1xi1> to vector<2x128xi1>
      %65 = arith.select %64, %61, %62 : vector<2x128xi1>, vector<2x128xf32>
      %c0_43 = arith.constant 0 : index
      %c0_44 = arith.constant 0 : index
      %66 = vector.load %arg20[%c0_43, %c0_44] : memref<2x128xf32, #tpu.memory_space<vmem>>, vector<2x128xf32>
      tpu.vector_store %arg20[%c0_43, %c0_44], %65 {strides = array<i32>} : memref<2x128xf32, #tpu.memory_space<vmem>>, vector<2x128xf32>,
      %c1_i32_45 = arith.constant 1 : i32
      %67 = arith.cmpi eq, %arg1, %c1_i32_45 : i32
      %c1_i32_46 = arith.constant 1 : i32
      %68 = arith.cmpi eq, %arg2, %c1_i32_46 : i32
      %69 = arith.andi %67, %68 : i1
      %70 = arith.extui %69 : i1 to i32
      %c0_i32_47 = arith.constant 0 : i32
      %71 = arith.cmpi ne, %70, %c0_i32_47 : i32
      scf.if %71 {
        %c0_48 = arith.constant 0 : index
        %c0_49 = arith.constant 0 : index
        %72 = vector.load %arg17[%c0_48, %c0_49] : memref<1x128xf32, #tpu.memory_space<vmem>>, vector<1x128xf32>
        %cst_50 = arith.constant 0.001953125 : f32
        %73 = vector.broadcast %cst_50 : f32 to vector<1x128xf32>
        %74 = arith.mulf %72, %73 : vector<1x128xf32>
        %c0_51 = arith.constant 0 : index
        %c0_52 = arith.constant 0 : index
        %75 = vector.load %arg18[%c0_51, %c0_52] : memref<1x128xf32, #tpu.memory_space<vmem>>, vector<1x128xf32>
        %cst_53 = arith.constant 0.001953125 : f32
        %76 = vector.broadcast %cst_53 : f32 to vector<1x128xf32>
        %77 = arith.mulf %75, %76 : vector<1x128xf32>
        %78 = arith.mulf %74, %74 : vector<1x128xf32>
        %79 = arith.subf %77, %78 : vector<1x128xf32>
        %cst_54 = arith.constant 0.000000e+00 : f32
        %80 = vector.broadcast %cst_54 : f32 to vector<1x128xf32>
        %81 = arith.maximumf %79, %80 : vector<1x128xf32>
        %c0_55 = arith.constant 0 : index
        %c0_56 = arith.constant 0 : index
        %82 = vector.load %arg8[%c0_55, %c0_56] : memref<1x128xf32, #tpu.memory_space<vmem>>, vector<1x128xf32>
        %cst_57 = arith.constant 9.99999974E-6 : f32
        %83 = vector.broadcast %cst_57 : f32 to vector<1x128xf32>
        %84 = arith.addf %81, %83 : vector<1x128xf32>
        %85 = math.rsqrt %84 : vector<1x128xf32>
        %86 = arith.mulf %82, %85 : vector<1x128xf32>
        %c0_58 = arith.constant 0 : index
        %c0_59 = arith.constant 0 : index
        %87 = vector.load %arg9[%c0_58, %c0_59] : memref<1x128xf32, #tpu.memory_space<vmem>>, vector<1x128xf32>
        %88 = arith.mulf %74, %86 : vector<1x128xf32>
        %89 = arith.subf %87, %88 : vector<1x128xf32>
        %cst_60 = arith.constant 0.000000e+00 : f32
        %90 = vector.broadcast %cst_60 : f32 to vector<1x128xf32>
        %91 = arith.cmpf oge, %86, %90 : vector<1x128xf32>
        %c0_61 = arith.constant 0 : index
        %c0_62 = arith.constant 0 : index
        %92 = vector.load %arg19[%c0_61, %c0_62] : memref<2x128xf32, #tpu.memory_space<vmem>>, vector<2x128xf32>
        %c0_63 = arith.constant 0 : index
        %c0_64 = arith.constant 0 : index
        %93 = vector.load %arg20[%c0_63, %c0_64] : memref<2x128xf32, #tpu.memory_space<vmem>>, vector<2x128xf32>
        %94 = vector.shape_cast %91 : vector<1x128xi1> to vector<1x128xi1>
        %95 = vector.broadcast %94 : vector<1x128xi1> to vector<2x128xi1>
        %96 = arith.select %95, %92, %93 : vector<2x128xi1>, vector<2x128xf32>
        %97 = vector.broadcast %86 : vector<1x128xf32> to vector<2x128xf32>
        %98 = arith.mulf %96, %97 : vector<2x128xf32>
        %99 = vector.broadcast %89 : vector<1x128xf32> to vector<2x128xf32>
        %100 = arith.addf %98, %99 : vector<2x128xf32>
        %cst_65 = arith.constant 0.000000e+00 : f32
        %101 = vector.broadcast %cst_65 : f32 to vector<2x128xf32>
        %102 = arith.maximumf %100, %101 : vector<2x128xf32>
        %c0_66 = arith.constant 0 : index
        %c0_67 = arith.constant 0 : index
        %103 = vector.load %arg10[%c0_66, %c0_67] : memref<128x128xf32, #tpu.memory_space<vmem>>, vector<128x128xf32>
        %cst_68 = arith.constant dense<0.000000e+00> : vector<2x128xf32>
        %104 = tpu.matmul %102, %103, %cst_68 {dimension_numbers = #tpu.dot_dimension_numbers<[1], [0], [0], [1], [0, 0, 1, 1], [], []>} : vector<2x128xf32>, vector<128x128xf32>, vector<2x128xf32> -> vector<2x128xf32>
        %c0_69 = arith.constant 0 : index
        %c0_70 = arith.constant 0 : index
        %105 = vector.load %arg11[%c0_69, %c0_70] : memref<1x128xf32, #tpu.memory_space<vmem>>, vector<1x128xf32>
        %106 = vector.broadcast %105 : vector<1x128xf32> to vector<2x128xf32>
        %107 = arith.addf %104, %106 : vector<2x128xf32>
        %c0_71 = arith.constant 0 : index
        %c0_72 = arith.constant 0 : index
        %108 = vector.load %arg12[%c0_71, %c0_72] : memref<2x128xf32, #tpu.memory_space<vmem>>, vector<2x128xf32>
        tpu.vector_store %arg12[%c0_71, %c0_72], %107 {strides = array<i32>} : memref<2x128xf32, #tpu.memory_space<vmem>>, vector<2x128xf32>,
      } else {
      }
    } else {
    }
    return
  }
  func.func @transform_0(%arg0: i32, %arg1: i32, %arg2: i32) -> (i32, i32, i32) {
    %c0_i32 = arith.constant 0 : i32
    %c0_i32_0 = arith.constant 0 : i32
    return %arg1, %c0_i32, %arg2 : i32, i32, i32
  }
  func.func @transform_1(%arg0: i32, %arg1: i32, %arg2: i32) -> (i32, i32) {
    %c0_i32 = arith.constant 0 : i32
    %c0_i32_0 = arith.constant 0 : i32
    %c0_i32_1 = arith.constant 0 : i32
    return %c0_i32, %c0_i32_0 : i32, i32
  }
  func.func @transform_2(%arg0: i32, %arg1: i32, %arg2: i32) -> (i32, i32) {
    %c0_i32 = arith.constant 0 : i32
    %c0_i32_0 = arith.constant 0 : i32
    %c0_i32_1 = arith.constant 0 : i32
    return %c0_i32, %c0_i32_0 : i32, i32
  }
  func.func @transform_3(%arg0: i32, %arg1: i32, %arg2: i32) -> (i32, i32) {
    %c0_i32 = arith.constant 0 : i32
    %c0_i32_0 = arith.constant 0 : i32
    %c0_i32_1 = arith.constant 0 : i32
    return %c0_i32, %c0_i32_0 : i32, i32
  }
  func.func @transform_4(%arg0: i32, %arg1: i32, %arg2: i32) -> (i32, i32) {
    %c0_i32 = arith.constant 0 : i32
    %c0_i32_0 = arith.constant 0 : i32
    %c0_i32_1 = arith.constant 0 : i32
    return %c0_i32, %c0_i32_0 : i32, i32
  }
  func.func @transform_5(%arg0: i32, %arg1: i32, %arg2: i32) -> (i32, i32) {
    %c0_i32 = arith.constant 0 : i32
    %c0_i32_0 = arith.constant 0 : i32
    %c0_i32_1 = arith.constant 0 : i32
    return %c0_i32, %c0_i32_0 : i32, i32
  }
  func.func @transform_6(%arg0: i32, %arg1: i32, %arg2: i32) -> (i32, i32) {
    %c0_i32 = arith.constant 0 : i32
    %c0_i32_0 = arith.constant 0 : i32
    %c0_i32_1 = arith.constant 0 : i32
    return %c0_i32, %c0_i32_0 : i32, i32
  }
  func.func @transform_7(%arg0: i32, %arg1: i32, %arg2: i32) -> (i32, i32) {
    %c0_i32 = arith.constant 0 : i32
    %c0_i32_0 = arith.constant 0 : i32
    %c0_i32_1 = arith.constant 0 : i32
    return %c0_i32, %c0_i32_0 : i32, i32
  }
  func.func @transform_8(%arg0: i32, %arg1: i32, %arg2: i32) -> (i32, i32) {
    %c0_i32 = arith.constant 0 : i32
    %c0_i32_0 = arith.constant 0 : i32
    %c0_i32_1 = arith.constant 0 : i32
    return %c0_i32, %c0_i32_0 : i32, i32
  }
  func.func @transform_9(%arg0: i32, %arg1: i32, %arg2: i32) -> (i32, i32) {
    %c0_i32 = arith.constant 0 : i32
    %c0_i32_0 = arith.constant 0 : i32
    %c0_i32_1 = arith.constant 0 : i32
    return %c0_i32, %c0_i32_0 : i32, i32
  }
}

</mosaic_0001>

<llo_original>
// kernel: tpu_custom_call.1
$region0: #{tpu_custom_call.1}
  #allocation0 [shape = 'u32[]', space=smem, size = 0x4, offset = 0x4, fixed_abs, tag = 'smem constant byte address 0x4 - core index']
  #allocation1 [shape = 'u32[144,128]{1,0:T(1,128)}', space=vmem, size = 0x12000, scoped, tag = 'internal scratch']
  #allocation2 [shape = 'f32[1,64]{1,0:T(1,128)}', space=vmem, size = 0x200, scoped, tag = 'scratch operand']
  #allocation3 [shape = 'f32[1,64]{1,0:T(1,128)}', space=vmem, size = 0x200, scoped, tag = 'scratch operand']
  #allocation4 [shape = 'f32[1,64]{1,0:T(1,128)}', space=vmem, size = 0x200, scoped, tag = 'scratch operand']
  #allocation5 [shape = 'f32[1,64]{1,0:T(1,128)}', space=vmem, size = 0x200, scoped, tag = 'scratch operand']
  #allocation6 [shape = 'f32[1,128]{1,0:T(1,128)}', space=vmem, size = 0x200, scoped, tag = 'scratch operand']
  #allocation7 [shape = 'f32[1,128]{1,0:T(1,128)}', space=vmem, size = 0x200, scoped, tag = 'scratch operand']
  #allocation8 [shape = 'f32[2,128]{1,0:T(2,128)}', space=vmem, size = 0x400, scoped, tag = 'scratch operand']
  #allocation9 [shape = 'f32[2,128]{1,0:T(2,128)}', space=vmem, size = 0x400, scoped, tag = 'scratch operand']
  %s0 = inlined_call_operand.hbm [shape: f32[2,4,256], index: 0, kind: input, shape index: {}]
  %s1 = inlined_call_operand.vmem [shape: f32[64,4], index: 1, kind: input, shape index: {}]
  %s2 = inlined_call_operand.vmem [shape: f32[1,64], index: 2, kind: input, shape index: {}]
  %s3 = inlined_call_operand.vmem [shape: f32[1,64], index: 3, kind: input, shape index: {}]
  %s4 = inlined_call_operand.vmem [shape: f32[64,128], index: 4, kind: input, shape index: {}]
  %s5 = inlined_call_operand.vmem [shape: f32[1,128], index: 5, kind: input, shape index: {}]
  %s6 = inlined_call_operand.vmem [shape: f32[1,128], index: 6, kind: input, shape index: {}]
  %s7 = inlined_call_operand.hbm [shape: f32[128,128], index: 7, kind: input, shape index: {}]
  %s8 = inlined_call_operand.vmem [shape: f32[1,128], index: 8, kind: input, shape index: {}]
  %s9 = inlined_call_operand.hbm [shape: f32[2,128], index: 9, kind: output, shape index: {}]
  %s10 = sld [smem:[#allocation0]]
  $region97: #{tpu_custom_call.1} parent=0
    _
  %s12 = ssub.s32 1, %s10
  %s13 = scalar_select 0, %s12, %s10
  $region1: #{tpu_custom_call.1} parent=0
    #allocation10 [shape = 'u8[4096]{0}', space=vmem, size = 0x1000, scoped, tag = 'input window, operand 0']
    #allocation11 [shape = 's32[2]{0}', space=sflag, size = 0x8, scoped, tag = 'scoped memory for tpu_custom_call.1']
    #allocation12 [shape = 's32[2]{0}', space=sflag, size = 0x8, scoped, tag = 'scoped memory for tpu_custom_call.1']
    #allocation13 [shape = 'u8[65536]{0}', space=vmem, size = 0x10000, scoped, tag = 'input window, operand 7, single buffered']
    #allocation14 [shape = 's32[1]{0}', space=sflag, size = 0x4, scoped, tag = 'scoped memory for tpu_custom_call.1']
    #allocation15 [shape = 'u8[1024]{0}', space=vmem, size = 0x400, scoped, tag = 'output window, operand 0, single buffered']
    %14 = vsyncpa [#allocation11], 0
    %s15 = scalar_lea.sflag [#allocation11], 1
    %16 = vsyncpa %s15, 0
    %17 = vsyncpa [#allocation14], 0
    %18 = vsyncpa [#allocation12], 0
    loop: start=0, step=1, limit=10
    $region2: #{tpu_custom_call.1} parent=1 // loop_pre_header
      _
    $region3: #{tpu_custom_call.1} parent=1 // loop_header
      %s20 = sphi 0, %s24
      %p21 = scmp.ge.s32.totalorder %s20, 10
      %s27 = sphi 0, %s46
      %s28 = sphi 0, %s42
      %s29 = sphi 0, %s38
      %s30 = sphi 0, %s27
      %s31 = sphi 0, %s28
      %s32 = sphi 0, %s29
      %s33 = sphi 0, %s30
      %s34 = sphi 0, %s31
      %s35 = sphi 0, %s32
      %s51 = sphi 0, %s53
      %s54 = sphi 0, %s51
      %s55 = sphi 0, %s54
      %s71 = sphi 0, %s55
      %s75 = sphi 0, %s75
      %s77 = sphi 0, %s75
      %s78 = sphi 0, %s77
      %s92 = sphi 0, %s78
      %s96 = sphi 0, %s96
      %s98 = sphi 0, %s96
      %s99 = sphi 0, %s98
      %s113 = sphi 0, %s99
      %s117 = sphi 0, %s117
      %s119 = sphi 0, %s117
      %s120 = sphi 0, %s119
      %s134 = sphi 0, %s120
      %s138 = sphi 0, %s138
      %s140 = sphi 0, %s138
      %s141 = sphi 0, %s140
      %s155 = sphi 0, %s141
      %s159 = sphi 0, %s159
      %s161 = sphi 0, %s159
      %s162 = sphi 0, %s161
      %s176 = sphi 0, %s162
      %s180 = sphi 0, %s180
      %s182 = sphi 0, %s180
      %s183 = sphi 0, %s182
      %s197 = sphi 0, %s183
      %s201 = sphi 0, %s201
      %s203 = sphi 0, %s201
      %s204 = sphi 0, %s203
      %s218 = sphi 0, %s204
      %s222 = sphi 0, %s222
      %s224 = sphi 0, %s222
      %s225 = sphi 0, %s224
      %s239 = sphi 0, %s225
      %s243 = sphi 0, %s243
      %s245 = sphi 0, %s243
      %s246 = sphi 0, %s245
      %s260 = sphi 0, %s246
    $region4: #{tpu_custom_call.1} parent=1 // loop_header_branch
      %23 = sbr.rel (%p21) target = $region8
    $region5: #{tpu_custom_call.1} parent=1 // loop_body
      %s25 = ssub.s32 %s20, 1
      %s26 = ssub.s32 %s20, 2
      %s36 = sadd.s32 1, %s29
      %p37 = scmp.ge.s32.totalorder %s36, 2
      %s38 = scalar_select %p37, 0, %s36
      %s39 = sadd.s32 1, %s28
      %s40 = scalar_select %p37, %s39, %s28
      %p41 = scmp.ge.s32.totalorder %s40, 2
      %s42 = scalar_select %p41, 0, %s40
      %s43 = sadd.s32 1, %s27
      %s44 = scalar_select %p41, %s43, %s27
      %p45 = scmp.ge.s32.totalorder %s44, 2
      %s46 = scalar_select %p45, 0, %s44
      %s47 = ssub.s32 %s28, %s42
      %s48 = ssub.s32 %s29, %s38
      %s49 = sor.u32 %s47, %s48
      %p50 = scmp.eq.s32.totalorder %s49, 0
      %s52 = sadd.s32 %s51, 1
      %s53 = scalar_select %p50, %s51, %s52
      %p56 = pneg %p50
      %p57 = scmp.eq.s32.totalorder %s20, 7
      %p58 = por %p56, %p57
      %p59 = scmp.ne.s32.totalorder %s51, %s54
      %p60 = scmp.eq.s32.totalorder %s20, 0
      %p61 = por %p59, %p60
      %p62 = scmp.ne.s32.totalorder %s51, %s54
      %p63 = scmp.eq.s32.totalorder %s25, 7
      %p64 = por %p62, %p63
      %p65 = scmp.ne.s32.totalorder %s54, %s55
      %p66 = scmp.eq.s32.totalorder %s25, 0
      %p67 = por %p65, %p66
      %p68 = scmp.ne.s32.totalorder %s54, %s55
      %p69 = scmp.eq.s32.totalorder %s26, 7
      %p70 = por %p68, %p69
      %p72 = scmp.ne.s32.totalorder %s55, %s71
      %p73 = scmp.eq.s32.totalorder %s26, 0
      %p74 = por %p72, %p73
      %s76 = sadd.s32 %s75, 1
      %p79 = scmp.eq.s32.totalorder %s20, 7
      %p80 = scmp.ne.s32.totalorder %s75, %s77
      %p81 = scmp.eq.s32.totalorder %s20, 0
      %p82 = por %p80, %p81
      %p83 = scmp.ne.s32.totalorder %s75, %s77
      %p84 = scmp.eq.s32.totalorder %s25, 7
      %p85 = por %p83, %p84
      %p86 = scmp.ne.s32.totalorder %s77, %s78
      %p87 = scmp.eq.s32.totalorder %s25, 0
      %p88 = por %p86, %p87
      %p89 = scmp.ne.s32.totalorder %s77, %s78
      %p90 = scmp.eq.s32.totalorder %s26, 7
      %p91 = por %p89, %p90
      %p93 = scmp.ne.s32.totalorder %s78, %s92
      %p94 = scmp.eq.s32.totalorder %s26, 0
      %p95 = por %p93, %p94
      %s97 = sadd.s32 %s96, 1
      %p100 = scmp.eq.s32.totalorder %s20, 7
      %p101 = scmp.ne.s32.totalorder %s96, %s98
      %p102 = scmp.eq.s32.totalorder %s20, 0
      %p103 = por %p101, %p102
      %p104 = scmp.ne.s32.totalorder %s96, %s98
      %p105 = scmp.eq.s32.totalorder %s25, 7
      %p106 = por %p104, %p105
      %p107 = scmp.ne.s32.totalorder %s98, %s99
      %p108 = scmp.eq.s32.totalorder %s25, 0
      %p109 = por %p107, %p108
      %p110 = scmp.ne.s32.totalorder %s98, %s99
      %p111 = scmp.eq.s32.totalorder %s26, 7
      %p112 = por %p110, %p111
      %p114 = scmp.ne.s32.totalorder %s99, %s113
      %p115 = scmp.eq.s32.totalorder %s26, 0
      %p116 = por %p114, %p115
      %s118 = sadd.s32 %s117, 1
      %p121 = scmp.eq.s32.totalorder %s20, 7
      %p122 = scmp.ne.s32.totalorder %s117, %s119
      %p123 = scmp.eq.s32.totalorder %s20, 0
      %p124 = por %p122, %p123
      %p125 = scmp.ne.s32.totalorder %s117, %s119
      %p126 = scmp.eq.s32.totalorder %s25, 7
      %p127 = por %p125, %p126
      %p128 = scmp.ne.s32.totalorder %s119, %s120
      %p129 = scmp.eq.s32.totalorder %s25, 0
      %p130 = por %p128, %p129
      %p131 = scmp.ne.s32.totalorder %s119, %s120
      %p132 = scmp.eq.s32.totalorder %s26, 7
      %p133 = por %p131, %p132
      %p135 = scmp.ne.s32.totalorder %s120, %s134
      %p136 = scmp.eq.s32.totalorder %s26, 0
      %p137 = por %p135, %p136
      %s139 = sadd.s32 %s138, 1
      %p142 = scmp.eq.s32.totalorder %s20, 7
      %p143 = scmp.ne.s32.totalorder %s138, %s140
      %p144 = scmp.eq.s32.totalorder %s20, 0
      %p145 = por %p143, %p144
      %p146 = scmp.ne.s32.totalorder %s138, %s140
      %p147 = scmp.eq.s32.totalorder %s25, 7
      %p148 = por %p146, %p147
      %p149 = scmp.ne.s32.totalorder %s140, %s141
      %p150 = scmp.eq.s32.totalorder %s25, 0
      %p151 = por %p149, %p150
      %p152 = scmp.ne.s32.totalorder %s140, %s141
      %p153 = scmp.eq.s32.totalorder %s26, 7
      %p154 = por %p152, %p153
      %p156 = scmp.ne.s32.totalorder %s141, %s155
      %p157 = scmp.eq.s32.totalorder %s26, 0
      %p158 = por %p156, %p157
      %s160 = sadd.s32 %s159, 1
      %p163 = scmp.eq.s32.totalorder %s20, 7
      %p164 = scmp.ne.s32.totalorder %s159, %s161
      %p165 = scmp.eq.s32.totalorder %s20, 0
      %p166 = por %p164, %p165
      %p167 = scmp.ne.s32.totalorder %s159, %s161
      %p168 = scmp.eq.s32.totalorder %s25, 7
      %p169 = por %p167, %p168
      %p170 = scmp.ne.s32.totalorder %s161, %s162
      %p171 = scmp.eq.s32.totalorder %s25, 0
      %p172 = por %p170, %p171
      %p173 = scmp.ne.s32.totalorder %s161, %s162
      %p174 = scmp.eq.s32.totalorder %s26, 7
      %p175 = por %p173, %p174
      %p177 = scmp.ne.s32.totalorder %s162, %s176
      %p178 = scmp.eq.s32.totalorder %s26, 0
      %p179 = por %p177, %p178
      %s181 = sadd.s32 %s180, 1
      %p184 = scmp.eq.s32.totalorder %s20, 7
      %p185 = scmp.ne.s32.totalorder %s180, %s182
      %p186 = scmp.eq.s32.totalorder %s20, 0
      %p187 = por %p185, %p186
      %p188 = scmp.ne.s32.totalorder %s180, %s182
      %p189 = scmp.eq.s32.totalorder %s25, 7
      %p190 = por %p188, %p189
      %p191 = scmp.ne.s32.totalorder %s182, %s183
      %p192 = scmp.eq.s32.totalorder %s25, 0
      %p193 = por %p191, %p192
      %p194 = scmp.ne.s32.totalorder %s182, %s183
      %p195 = scmp.eq.s32.totalorder %s26, 7
      %p196 = por %p194, %p195
      %p198 = scmp.ne.s32.totalorder %s183, %s197
      %p199 = scmp.eq.s32.totalorder %s26, 0
      %p200 = por %p198, %p199
      %s202 = sadd.s32 %s201, 1
      %p205 = scmp.eq.s32.totalorder %s20, 7
      %p206 = scmp.ne.s32.totalorder %s201, %s203
      %p207 = scmp.eq.s32.totalorder %s20, 0
      %p208 = por %p206, %p207
      %p209 = scmp.ne.s32.totalorder %s201, %s203
      %p210 = scmp.eq.s32.totalorder %s25, 7
      %p211 = por %p209, %p210
      %p212 = scmp.ne.s32.totalorder %s203, %s204
      %p213 = scmp.eq.s32.totalorder %s25, 0
      %p214 = por %p212, %p213
      %p215 = scmp.ne.s32.totalorder %s203, %s204
      %p216 = scmp.eq.s32.totalorder %s26, 7
      %p217 = por %p215, %p216
      %p219 = scmp.ne.s32.totalorder %s204, %s218
      %p220 = scmp.eq.s32.totalorder %s26, 0
      %p221 = por %p219, %p220
      %s223 = sadd.s32 %s222, 1
      %p226 = scmp.eq.s32.totalorder %s20, 7
      %p227 = scmp.ne.s32.totalorder %s222, %s224
      %p228 = scmp.eq.s32.totalorder %s20, 0
      %p229 = por %p227, %p228
      %p230 = scmp.ne.s32.totalorder %s222, %s224
      %p231 = scmp.eq.s32.totalorder %s25, 7
      %p232 = por %p230, %p231
      %p233 = scmp.ne.s32.totalorder %s224, %s225
      %p234 = scmp.eq.s32.totalorder %s25, 0
      %p235 = por %p233, %p234
      %p236 = scmp.ne.s32.totalorder %s224, %s225
      %p237 = scmp.eq.s32.totalorder %s26, 7
      %p238 = por %p236, %p237
      %p240 = scmp.ne.s32.totalorder %s225, %s239
      %p241 = scmp.eq.s32.totalorder %s26, 0
      %p242 = por %p240, %p241
      %s244 = sadd.s32 %s243, 1
      %p247 = scmp.eq.s32.totalorder %s20, 7
      %p248 = scmp.ne.s32.totalorder %s243, %s245
      %p249 = scmp.eq.s32.totalorder %s20, 0
      %p250 = por %p248, %p249
      %p251 = scmp.ne.s32.totalorder %s243, %s245
      %p252 = scmp.eq.s32.totalorder %s25, 7
      %p253 = por %p251, %p252
      %p254 = scmp.ne.s32.totalorder %s245, %s246
      %p255 = scmp.eq.s32.totalorder %s25, 0
      %p256 = por %p254, %p255
      %p257 = scmp.ne.s32.totalorder %s245, %s246
      %p258 = scmp.eq.s32.totalorder %s26, 7
      %p259 = por %p257, %p258
      %p261 = scmp.ne.s32.totalorder %s246, %s260
      %p262 = scmp.eq.s32.totalorder %s26, 0
      %p263 = por %p261, %p262
      %p264 = scmp.le.s32.totalorder 1, %s20
      %p265 = scmp.lt.s32.totalorder %s20, 9
      %p266 = pnand %p264, %p265
      %p267 = pneg %p266
      // Predicated region
      $region9: #{tpu_custom_call.1} parent=5 // pred_check
        _
      $region10: #{tpu_custom_call.1} parent=5 // pred_check_branch
        %269 = sbr.rel (%p266) target = $region12
      $region11: #{tpu_custom_call.1} parent=5 // pred_region
        %s270 = ssub.s32 %s20, 1
        // Predicated region
        $region13: #{tpu_custom_call.1} parent=11 // pred_check
          %p271 = pneg %p88
        $region14: #{tpu_custom_call.1} parent=11 // pred_check_branch
          %273 = sbr.rel (%p271) target = $region16
        $region15: #{tpu_custom_call.1} parent=11 // pred_region
          _
        $region16: #{tpu_custom_call.1} parent=11 // pred_fallthru
          _
        // Predicated region
        $region17: #{tpu_custom_call.1} parent=11 // pred_check
          %p274 = pneg %p109
        $region18: #{tpu_custom_call.1} parent=11 // pred_check_branch
          %276 = sbr.rel (%p274) target = $region20
        $region19: #{tpu_custom_call.1} parent=11 // pred_region
          _
        $region20: #{tpu_custom_call.1} parent=11 // pred_fallthru
          _
        // Predicated region
        $region21: #{tpu_custom_call.1} parent=11 // pred_check
          %p277 = pneg %p130
        $region22: #{tpu_custom_call.1} parent=11 // pred_check_branch
          %279 = sbr.rel (%p277) target = $region24
        $region23: #{tpu_custom_call.1} parent=11 // pred_region
          _
        $region24: #{tpu_custom_call.1} parent=11 // pred_fallthru
          _
        // Predicated region
        $region25: #{tpu_custom_call.1} parent=11 // pred_check
          %p280 = pneg %p151
        $region26: #{tpu_custom_call.1} parent=11 // pred_check_branch
          %282 = sbr.rel (%p280) target = $region28
        $region27: #{tpu_custom_call.1} parent=11 // pred_region
          _
        $region28: #{tpu_custom_call.1} parent=11 // pred_fallthru
          _
        // Predicated region
        $region29: #{tpu_custom_call.1} parent=11 // pred_check
          %p283 = pneg %p172
        $region30: #{tpu_custom_call.1} parent=11 // pred_check_branch
          %285 = sbr.rel (%p283) target = $region32
        $region31: #{tpu_custom_call.1} parent=11 // pred_region
          _
        $region32: #{tpu_custom_call.1} parent=11 // pred_fallthru
          _
        // Predicated region
        $region33: #{tpu_custom_call.1} parent=11 // pred_check
          %p286 = pneg %p193
        $region34: #{tpu_custom_call.1} parent=11 // pred_check_branch
          %288 = sbr.rel (%p286) target = $region36
        $region35: #{tpu_custom_call.1} parent=11 // pred_region
          _
        $region36: #{tpu_custom_call.1} parent=11 // pred_fallthru
          _
        // Predicated region
        $region37: #{tpu_custom_call.1} parent=11 // pred_check
          %p289 = pneg %p214
        $region38: #{tpu_custom_call.1} parent=11 // pred_check_branch
          %291 = sbr.rel (%p289) target = $region40
        $region39: #{tpu_custom_call.1} parent=11 // pred_region
          %s293 = ssub.s32 2048, 2048
          %294 = vsyncadd [#allocation14], %s293
          %s295 = sshll.u32 [#allocation13], 4
          %s296 = int_to_ptr.vmem [resolvable:$true] %s295
          %301 = dma.hbm_to_vmem [thread:$0]  %s7, 2048, %s296, [#allocation14], 128, 128, 8
        $region40: #{tpu_custom_call.1} parent=11 // pred_fallthru
          _
        // Predicated region
        $region41: #{tpu_custom_call.1} parent=11 // pred_check
          %p302 = pneg %p235
        $region42: #{tpu_custom_call.1} parent=11 // pred_check_branch
          %304 = sbr.rel (%p302) target = $region44
        $region43: #{tpu_custom_call.1} parent=11 // pred_region
          _
        $region44: #{tpu_custom_call.1} parent=11 // pred_fallthru
          _
      $region12: #{tpu_custom_call.1} parent=5 // pred_fallthru
        _
      %p305 = scmp.lt.s32.totalorder %s20, 8
      // Predicated region
      $region45: #{tpu_custom_call.1} parent=5 // pred_check
        %p306 = pneg %p305
      $region46: #{tpu_custom_call.1} parent=5 // pred_check_branch
        %308 = sbr.rel (%p306) target = $region48
      $region47: #{tpu_custom_call.1} parent=5 // pred_region
        // Predicated region
        $region49: #{tpu_custom_call.1} parent=47 // pred_check
          %p309 = pneg %p61
        $region50: #{tpu_custom_call.1} parent=47 // pred_check_branch
          %311 = sbr.rel (%p309) target = $region52
        $region51: #{tpu_custom_call.1} parent=47 // pred_region
          %s312 = sand.u32 %s51, 1
          %s313 = scalar_lea.sflag [#allocation11], %s312
          %s314 = sand.u32 %s51, 1
          %s315 = smul.addr %s314, 4
          %s316 = scalar_lea.vmem [#allocation10], %s315
          %s318 = ssub.s32 64, 64
          %319 = vsyncadd %s313, %s318
          %s320 = smul.addr %s28, 2
          %s321 = sadd.s32 %s29, %s320
          %s322 = smul.addr %s321, 64
          %s323 = scalar_lea.hbm %s0, %s322
          %s325 = sshll.u32 %s316, 4
          %s326 = int_to_ptr.vmem [resolvable:$true] %s325
          %328 = dma.hbm_to_vmem [thread:$0]  %s323, 64, %s326, %s313
        $region52: #{tpu_custom_call.1} parent=47 // pred_fallthru
          _
      $region48: #{tpu_custom_call.1} parent=5 // pred_fallthru
        _
      %p329 = scmp.le.s32.totalorder 1, %s20
      %p330 = scmp.lt.s32.totalorder %s20, 9
      %p331 = pnand %p329, %p330
      %p332 = pneg %p331
      // Predicated region
      $region53: #{tpu_custom_call.1} parent=5 // pred_check
        _
      $region54: #{tpu_custom_call.1} parent=5 // pred_check_branch
        %334 = sbr.rel (%p331) target = $region56
      $region55: #{tpu_custom_call.1} parent=5 // pred_region
        %s335 = ssub.s32 %s20, 1
        %s336 = sand.u32 %s54, 1
        %s337 = scalar_lea.sflag [#allocation11], %s336
        %s338 = sand.u32 %s54, 1
        %s339 = smul.addr %s338, 4
        %s340 = scalar_lea.vmem [#allocation10], %s339
        // Predicated region
        $region57: #{tpu_custom_call.1} parent=55 // pred_check
          %p341 = pneg %p67
        $region58: #{tpu_custom_call.1} parent=55 // pred_check_branch
          %343 = sbr.rel (%p341) target = $region60
        $region59: #{tpu_custom_call.1} parent=55 // pred_region
          %344 = dma.done %s337, 64
        $region60: #{tpu_custom_call.1} parent=55 // pred_fallthru
          _
        // Predicated region
        $region61: #{tpu_custom_call.1} parent=55 // pred_check
          %p345 = pneg %p214
        $region62: #{tpu_custom_call.1} parent=55 // pred_check_branch
          %347 = sbr.rel (%p345) target = $region64
        $region63: #{tpu_custom_call.1} parent=55 // pred_region
          %348 = dma.done [#allocation14], 2048
        $region64: #{tpu_custom_call.1} parent=55 // pred_fallthru
          _
        %s349 = sand.u32 %s54, 1
        %s350 = scalar_lea.sflag [#allocation11], %s349
        %s351 = sand.u32 %s54, 1
        %s352 = smul.addr %s351, 4
        %s353 = scalar_lea.vmem [#allocation10], %s352
        %p354 = pneg %p67
        %p355 = pneg %p64
        %p356 = pneg %p88
        %p357 = pneg %p85
        %p358 = pneg %p109
        %p359 = pneg %p106
        %p360 = pneg %p130
        %p361 = pneg %p127
        %p362 = pneg %p151
        %p363 = pneg %p148
        %p364 = pneg %p172
        %p365 = pneg %p169
        %p366 = pneg %p193
        %p367 = pneg %p190
        %p368 = pneg %p214
        %p369 = pneg %p211
        %p370 = pneg %p235
        %p371 = pneg %p232
        %p372 = pneg %p256
        %p373 = pneg %p253
        %p374 = scmp.eq.s32.totalorder %s30, 0
        %p375 = scmp.eq.s32.totalorder %s31, 0
        %p376 = pnand %p374, %p375
        %p377 = pneg %p376
        %p378 = scmp.eq.s32.totalorder %s32, 0
        %p379 = pnand %p377, %p378
        %p380 = pneg %p379
        // Predicated region
        $region65: #{tpu_custom_call.1} parent=55 // pred_check
          _
        $region66: #{tpu_custom_call.1} parent=55 // pred_check_branch
          %382 = sbr.rel (%p379) target = $region68
        $region67: #{tpu_custom_call.1} parent=55 // pred_region
          %vm383 = vcmask 516096
          %384 = vst.msk [vmem:[#allocation2] sm:$0x1] %vm383, 0.0
          %385 = vst.msk [vmem:[#allocation3] sm:$0x1] %vm383, 0.0
        $region68: #{tpu_custom_call.1} parent=55 // pred_fallthru
          _
        %v386 = vld [vmem:[%s340] sm:$0xf]
        %v387 = vld [vmem:[%s1] sm:$0xff]
        %v388 = vld [vmem:[%s1 + $0x8] sm:$0xff]
        %v389 = vld [vmem:[%s1 + $0x10] sm:$0xff]
        %v390 = vld [vmem:[%s1 + $0x18] sm:$0xff]
        %v391 = vld [vmem:[%s1 + $0x20] sm:$0xff]
        %v392 = vld [vmem:[%s1 + $0x28] sm:$0xff]
        %v393 = vld [vmem:[%s1 + $0x30] sm:$0xff]
        %v394 = vld [vmem:[%s1 + $0x38] sm:$0xff]
        %vm395 = vcmask 31744
        %v397 = vsel %vm395, %v387, 0
        %v400 = vsel %vm395, %v388, 0
        %v403 = vsel %vm395, %v389, 0
        %v406 = vsel %vm395, %v390, 0
        %v409 = vsel %vm395, %v391, 0
        %v412 = vsel %vm395, %v392, 0
        %v415 = vsel %vm395, %v393, 0
        %v418 = vsel %vm395, %v394, 0
        %vm420 = vcmask 1043456
        %v422 = vsel %vm420, %v386, 0
        %424 = vmatprep.subr.mxu0 0.0
        %425 = vmatpush1.msra.mxu0 0.0
        %426 = vmatprep.subr.mxu0 0.0
        %427 = vmatpush1.msra.mxu0 0.0
        %428 = vmatprep.subr.mxu0 0.0
        %429 = vmatpush1.msra.mxu0 0.0
        %430 = vmatprep.subr.mxu0 0.0
        %431 = vmatpush1.msra.mxu0 0.0
        %432 = vmatprep.subr.mxu0 0.0
        %433 = vmatpush1.msra.mxu0 0.0
        %434 = vmatprep.subr.mxu0 0.0
        %435 = vmatpush1.msra.mxu0 0.0
        %436 = vmatprep.subr.mxu0 0.0
        %437 = vmatpush1.msra.mxu0 0.0
        %438 = vmatprep.subr.mxu0 0.0
        %439 = vmatpush1.msra.mxu0 0.0
        %440 = vmatprep.subr.mxu0 0.0
        %441 = vmatpush1.msra.mxu0 0.0
        %442 = vmatprep.subr.mxu0 0.0
        %443 = vmatpush1.msra.mxu0 0.0
        %444 = vmatprep.subr.mxu0 0.0
        %445 = vmatpush1.msra.mxu0 0.0
        %446 = vmatprep.subr.mxu0 0.0
        %447 = vmatpush1.msra.mxu0 0.0
        %448 = vmatprep.subr.mxu0 0.0
        %449 = vmatpush1.msra.mxu0 0.0
        %450 = vmatprep.subr.mxu0 0.0
        %451 = vmatpush1.msra.mxu0 0.0
        %452 = vmatprep.subr.mxu0 0.0
        %453 = vmatpush1.msra.mxu0 0.0
        %454 = vmatprep.subr.mxu0 0.0
        %455 = vmatpush1.msra.mxu0 %v422
        %456 = vmatprep.subr.mxu0 0.0
        %457 = vmatpush2.msra.mxu0 0.0
        %458 = vmatprep.subr.mxu0 0.0
        %459 = vmatpush2.msra.mxu0 0.0
        %460 = vmatprep.subr.mxu0 0.0
        %461 = vmatpush2.msra.mxu0 0.0
        %462 = vmatprep.subr.mxu0 0.0
        %463 = vmatpush2.msra.mxu0 0.0
        %464 = vmatprep.subr.mxu0 0.0
        %465 = vmatpush2.msra.mxu0 0.0
        %466 = vmatprep.subr.mxu0 0.0
        %467 = vmatpush2.msra.mxu0 0.0
        %468 = vmatprep.subr.mxu0 0.0
        %469 = vmatpush2.msra.mxu0 0.0
        %470 = vmatprep.subr.mxu0 0.0
        %471 = vmatpush2.msra.mxu0 0.0
        %472 = vmatprep.subr.mxu0 0.0
        %473 = vmatpush2.msra.mxu0 0.0
        %474 = vmatprep.subr.mxu0 0.0
        %475 = vmatpush2.msra.mxu0 0.0
        %476 = vmatprep.subr.mxu0 0.0
        %477 = vmatpush2.msra.mxu0 0.0
        %478 = vmatprep.subr.mxu0 0.0
        %479 = vmatpush2.msra.mxu0 0.0
        %480 = vmatprep.subr.mxu0 0.0
        %481 = vmatpush2.msra.mxu0 0.0
        %482 = vmatprep.subr.mxu0 0.0
        %483 = vmatpush2.msra.mxu0 0.0
        %484 = vmatprep.subr.mxu0 0.0
        %485 = vmatpush2.msra.mxu0 0.0
        %486 = vmatprep.subr.mxu0 0.0
        %487 = vmatpush2.msra.mxu0 0.0
        %488 = vmatprep.mubr.f32.mxu0 0.0
        %489 = vmatmul.mubr.f32.gmra.mxu0 %v397
        %v490 = vpop.f32.mrf.mxu0
        %v491 = vadd.f32 0.0, %v490
        %v492 = vpop.f32.mrf.mxu0
        %493 = vmatprep.mubr.f32.mxu0 0.0
        %494 = vmatmul.mubr.f32.gmra.mxu0 %v400
        %v495 = vpop.f32.mrf.mxu0
        %v496 = vadd.f32 0.0, %v495
        %v497 = vpop.f32.mrf.mxu0
        %498 = vmatprep.mubr.f32.mxu0 0.0
        %499 = vmatmul.mubr.f32.gmra.mxu0 %v403
        %v500 = vpop.f32.mrf.mxu0
        %v501 = vadd.f32 0.0, %v500
        %v502 = vpop.f32.mrf.mxu0
        %503 = vmatprep.mubr.f32.mxu0 0.0
        %504 = vmatmul.mubr.f32.gmra.mxu0 %v406
        %v505 = vpop.f32.mrf.mxu0
        %v506 = vadd.f32 0.0, %v505
        %v507 = vpop.f32.mrf.mxu0
        %508 = vmatprep.mubr.f32.mxu0 0.0
        %509 = vmatmul.mubr.f32.gmra.mxu0 %v409
        %v510 = vpop.f32.mrf.mxu0
        %v511 = vadd.f32 0.0, %v510
        %v512 = vpop.f32.mrf.mxu0
        %513 = vmatprep.mubr.f32.mxu0 0.0
        %514 = vmatmul.mubr.f32.gmra.mxu0 %v412
        %v515 = vpop.f32.mrf.mxu0
        %v516 = vadd.f32 0.0, %v515
        %v517 = vpop.f32.mrf.mxu0
        %518 = vmatprep.mubr.f32.mxu0 0.0
        %519 = vmatmul.mubr.f32.gmra.mxu0 %v415
        %v520 = vpop.f32.mrf.mxu0
        %v521 = vadd.f32 0.0, %v520
        %v522 = vpop.f32.mrf.mxu0
        %523 = vmatprep.mubr.f32.mxu0 0.0
        %524 = vmatmul.mubr.f32.gmra.mxu0 %v418
        %v525 = vpop.f32.mrf.mxu0
        %v526 = vadd.f32 0.0, %v525
        %v527 = vpop.f32.mrf.mxu0
        %528 = vdwg.mxu0
        %529 = vxpose.xlu0.b32.start [1/16] %v491, 128
        %530 = vxpose.xlu0.b32.cont [2/16] %v496, 128
        %531 = vxpose.xlu0.b32.cont [3/16] %v501, 128
        %532 = vxpose.xlu0.b32.cont [4/16] %v506, 128
        %533 = vxpose.xlu0.b32.cont [5/16] %v511, 128
        %534 = vxpose.xlu0.b32.cont [6/16] %v516, 128
        %535 = vxpose.xlu0.b32.cont [7/16] %v521, 128
        %536 = vxpose.xlu0.b32.cont [8/16] %v526, 128
        %537 = vxpose.xlu0.b32.cont [9/16] 0.0, 128
        %538 = vxpose.xlu0.b32.cont [10/16] 0.0, 128
        %539 = vxpose.xlu0.b32.cont [11/16] 0.0, 128
        %540 = vxpose.xlu0.b32.cont [12/16] 0.0, 128
        %541 = vxpose.xlu0.b32.cont [13/16] 0.0, 128
        %542 = vxpose.xlu0.b32.cont [14/16] 0.0, 128
        %543 = vxpose.xlu0.b32.cont [15/16] 0.0, 128
        %544 = vxpose.xlu0.b32.end [16/16] 0.0, 128
        %v545 = vpop.trf.xlu0
        %v546 = vpop.trf.xlu0
        %v547 = vpop.trf.xlu0
        %v548 = vpop.trf.xlu0
        %v549 = vpop.trf.xlu0
        %v550 = vpop.trf.xlu0
        %v551 = vpop.trf.xlu0
        %v552 = vpop.trf.xlu0
        %v553 = vpop.trf.xlu0
        %v554 = vpop.trf.xlu0
        %v555 = vpop.trf.xlu0
        %v556 = vpop.trf.xlu0
        %v557 = vpop.trf.xlu0
        %v558 = vpop.trf.xlu0
        %v559 = vpop.trf.xlu0
        %v560 = vpop.trf.xlu0
        // Predicated region
        $region69: #{tpu_custom_call.1} parent=55 // pred_check
          %p561 = pneg %p374
        $region70: #{tpu_custom_call.1} parent=55 // pred_check_branch
          %563 = sbr.rel (%p561) target = $region72
        $region71: #{tpu_custom_call.1} parent=55 // pred_region
          %v564 = vld [vmem:[#allocation2] sm:$0x1]
          %vm565 = vcmask 523264
          %v566 = vsel %vm565, %v545, 0.0
          %v567 = vsel %vm565, %v546, 0.0
          %v568 = vadd.f32 %v566, %v567
          %v569 = vsel %vm565, %v547, 0.0
          %v570 = vadd.f32 %v568, %v569
          %v571 = vsel %vm565, %v548, 0.0
          %v572 = vadd.f32 %v570, %v571
          %v573 = vsel %vm565, %v549, 0.0
          %v574 = vadd.f32 %v572, %v573
          %v575 = vsel %vm565, %v550, 0.0
          %v576 = vadd.f32 %v574, %v575
          %v577 = vsel %vm565, %v551, 0.0
          %v578 = vadd.f32 %v576, %v577
          %v579 = vsel %vm565, %v552, 0.0
          %v580 = vadd.f32 %v578, %v579
          %v581 = vsel %vm565, %v553, 0.0
          %v582 = vadd.f32 %v580, %v581
          %v583 = vsel %vm565, %v554, 0.0
          %v584 = vadd.f32 %v582, %v583
          %v585 = vsel %vm565, %v555, 0.0
          %v586 = vadd.f32 %v584, %v585
          %v587 = vsel %vm565, %v556, 0.0
          %v588 = vadd.f32 %v586, %v587
          %v589 = vsel %vm565, %v557, 0.0
          %v590 = vadd.f32 %v588, %v589
          %v591 = vsel %vm565, %v558, 0.0
          %v592 = vadd.f32 %v590, %v591
          %v593 = vsel %vm565, %v559, 0.0
          %v594 = vadd.f32 %v592, %v593
          %v595 = vsel %vm565, %v560, 0.0
          %v596 = vadd.f32 %v594, %v595
          %v597 = vrot.slane %v596, 4
          %v598 = vadd.f32 %v596, %v597
          %v599 = vrot.slane %v598, 2
          %v600 = vadd.f32 %v598, %v599
          %v601 = vrot.slane %v600, 1
          %v602 = vadd.f32 %v600, %v601
          %v603 = vadd.f32 %v564, %v602
          %vm604 = vcmask 516096
          %605 = vst.msk [vmem:[#allocation2] sm:$0x1] %vm604, %v603
          %v606 = vld [vmem:[#allocation3] sm:$0x1]
          %v607 = vmul.f32 %v545, %v545
          %v608 = vmul.f32 %v546, %v546
          %v609 = vmul.f32 %v547, %v547
          %v610 = vmul.f32 %v548, %v548
          %v611 = vmul.f32 %v549, %v549
          %v612 = vmul.f32 %v550, %v550
          %v613 = vmul.f32 %v551, %v551
          %v614 = vmul.f32 %v552, %v552
          %v615 = vmul.f32 %v553, %v553
          %v616 = vmul.f32 %v554, %v554
          %v617 = vmul.f32 %v555, %v555
          %v618 = vmul.f32 %v556, %v556
          %v619 = vmul.f32 %v557, %v557
          %v620 = vmul.f32 %v558, %v558
          %v621 = vmul.f32 %v559, %v559
          %v622 = vmul.f32 %v560, %v560
          %v623 = vsel %vm565, %v607, 0.0
          %v624 = vsel %vm565, %v608, 0.0
          %v625 = vadd.f32 %v623, %v624
          %v626 = vsel %vm565, %v609, 0.0
          %v627 = vadd.f32 %v625, %v626
          %v628 = vsel %vm565, %v610, 0.0
          %v629 = vadd.f32 %v627, %v628
          %v630 = vsel %vm565, %v611, 0.0
          %v631 = vadd.f32 %v629, %v630
          %v632 = vsel %vm565, %v612, 0.0
          %v633 = vadd.f32 %v631, %v632
          %v634 = vsel %vm565, %v613, 0.0
          %v635 = vadd.f32 %v633, %v634
          %v636 = vsel %vm565, %v614, 0.0
          %v637 = vadd.f32 %v635, %v636
          %v638 = vsel %vm565, %v615, 0.0
          %v639 = vadd.f32 %v637, %v638
          %v640 = vsel %vm565, %v616, 0.0
          %v641 = vadd.f32 %v639, %v640
          %v642 = vsel %vm565, %v617, 0.0
          %v643 = vadd.f32 %v641, %v642
          %v644 = vsel %vm565, %v618, 0.0
          %v645 = vadd.f32 %v643, %v644
          %v646 = vsel %vm565, %v619, 0.0
          %v647 = vadd.f32 %v645, %v646
          %v648 = vsel %vm565, %v620, 0.0
          %v649 = vadd.f32 %v647, %v648
          %v650 = vsel %vm565, %v621, 0.0
          %v651 = vadd.f32 %v649, %v650
          %v652 = vsel %vm565, %v622, 0.0
          %v653 = vadd.f32 %v651, %v652
          %v654 = vrot.slane %v653, 4
          %v655 = vadd.f32 %v653, %v654
          %v656 = vrot.slane %v655, 2
          %v657 = vadd.f32 %v655, %v656
          %v658 = vrot.slane %v657, 1
          %v659 = vadd.f32 %v657, %v658
          %v660 = vadd.f32 %v606, %v659
          %661 = vst.msk [vmem:[#allocation3] sm:$0x1] %vm604, %v660
        $region72: #{tpu_custom_call.1} parent=55 // pred_fallthru
          _
        %p662 = scmp.eq.s32.totalorder %s30, 1
        // Predicated region
        $region73: #{tpu_custom_call.1} parent=55 // pred_check
          %p663 = pneg %p662
        $region74: #{tpu_custom_call.1} parent=55 // pred_check_branch
          %665 = sbr.rel (%p663) target = $region76
        $region75: #{tpu_custom_call.1} parent=55 // pred_region
          %p666 = pnand %p375, %p378
          %p667 = pneg %p666
          // Predicated region
          $region77: #{tpu_custom_call.1} parent=75 // pred_check
            _
          $region78: #{tpu_custom_call.1} parent=75 // pred_check_branch
            %669 = sbr.rel (%p666) target = $region80
          $region79: #{tpu_custom_call.1} parent=75 // pred_region
            %v670 = vld [vmem:[#allocation2] sm:$0x1]
            %v671 = vmul.f32 %v670, 0.001953125
            %v672 = vld [vmem:[#allocation3] sm:$0x1]
            %v673 = vmul.f32 %v672, 0.001953125
            %v674 = vmul.f32 %v671, %v671
            %v675 = vsub.f32 %v673, %v674
            %v676 = vmax.f32 %v675, 0.0
            %v677 = vld [vmem:[%s2] sm:$0x1]
            %v678 = vadd.f32 %v676, 1e-05
            %v679 = vrsqrt.pop %v678
            %v680 = vmul.f32 %v677, %v679
            %vm681 = vcmask 516096
            %682 = vst.msk [vmem:[#allocation4] sm:$0x1] %vm681, %v680
            %v683 = vld [vmem:[%s3] sm:$0x1]
            %v684 = vmul.f32 %v671, %v680
            %v685 = vsub.f32 %v683, %v684
            %686 = vst.msk [vmem:[#allocation5] sm:$0x1] %vm681, %v685
            %687 = vst [vmem:[#allocation6] sm:$0x1] 0.0
            %688 = vst [vmem:[#allocation7] sm:$0x1] 0.0
            %689 = vst [vmem:[#allocation8] sm:$0x3] -inf
            %690 = vst [vmem:[#allocation9] sm:$0x3] inf
          $region80: #{tpu_custom_call.1} parent=75 // pred_fallthru
            _
          %v691 = vld [vmem:[#allocation4] sm:$0x1]
          %v693 = vlaneseq
          %v694 = vshrl.u32 %v693, 7
          %v695 = vsub.s32 0, %v694
          %v696 = vrot.slane %v691, %v695
          %v698 = vmul.f32 %v545, %v696
          %v699 = vmul.f32 %v546, %v696
          %v700 = vmul.f32 %v547, %v696
          %v701 = vmul.f32 %v548, %v696
          %v702 = vmul.f32 %v549, %v696
          %v703 = vmul.f32 %v550, %v696
          %v704 = vmul.f32 %v551, %v696
          %v705 = vmul.f32 %v552, %v696
          %v706 = vmul.f32 %v553, %v696
          %v707 = vmul.f32 %v554, %v696
          %v708 = vmul.f32 %v555, %v696
          %v709 = vmul.f32 %v556, %v696
          %v710 = vmul.f32 %v557, %v696
          %v711 = vmul.f32 %v558, %v696
          %v712 = vmul.f32 %v559, %v696
          %v713 = vmul.f32 %v560, %v696
          %v714 = vld [vmem:[#allocation5] sm:$0x1]
          %v716 = vlaneseq
          %v717 = vshrl.u32 %v716, 7
          %v718 = vsub.s32 0, %v717
          %v719 = vrot.slane %v714, %v718
          %v721 = vadd.f32 %v698, %v719
          %v722 = vadd.f32 %v699, %v719
          %v723 = vadd.f32 %v700, %v719
          %v724 = vadd.f32 %v701, %v719
          %v725 = vadd.f32 %v702, %v719
          %v726 = vadd.f32 %v703, %v719
          %v727 = vadd.f32 %v704, %v719
          %v728 = vadd.f32 %v705, %v719
          %v729 = vadd.f32 %v706, %v719
          %v730 = vadd.f32 %v707, %v719
          %v731 = vadd.f32 %v708, %v719
          %v732 = vadd.f32 %v709, %v719
          %v733 = vadd.f32 %v710, %v719
          %v734 = vadd.f32 %v711, %v719
          %v735 = vadd.f32 %v712, %v719
          %v736 = vadd.f32 %v713, %v719
          %v737 = vmax.f32 %v721, 0.0
          %v738 = vmax.f32 %v722, 0.0
          %v739 = vmax.f32 %v723, 0.0
          %v740 = vmax.f32 %v724, 0.0
          %v741 = vmax.f32 %v725, 0.0
          %v742 = vmax.f32 %v726, 0.0
          %v743 = vmax.f32 %v727, 0.0
          %v744 = vmax.f32 %v728, 0.0
          %v745 = vmax.f32 %v729, 0.0
          %v746 = vmax.f32 %v730, 0.0
          %v747 = vmax.f32 %v731, 0.0
          %v748 = vmax.f32 %v732, 0.0
          %v749 = vmax.f32 %v733, 0.0
          %v750 = vmax.f32 %v734, 0.0
          %v751 = vmax.f32 %v735, 0.0
          %v752 = vmax.f32 %v736, 0.0
          %v753 = vld [vmem:[%s4] sm:$0xff]
          %v754 = vld [vmem:[%s4 + $0x8] sm:$0xff]
          %v755 = vld [vmem:[%s4 + $0x10] sm:$0xff]
          %v756 = vld [vmem:[%s4 + $0x18] sm:$0xff]
          %v757 = vld [vmem:[%s4 + $0x20] sm:$0xff]
          %v758 = vld [vmem:[%s4 + $0x28] sm:$0xff]
          %v759 = vld [vmem:[%s4 + $0x30] sm:$0xff]
          %v760 = vld [vmem:[%s4 + $0x38] sm:$0xff]
          %vm761 = vcmask 523264
          %v763 = vsel %vm761, %v737, 0
          %v766 = vsel %vm761, %v738, 0
          %v769 = vsel %vm761, %v739, 0
          %v772 = vsel %vm761, %v740, 0
          %v775 = vsel %vm761, %v741, 0
          %v778 = vsel %vm761, %v742, 0
          %v781 = vsel %vm761, %v743, 0
          %v784 = vsel %vm761, %v744, 0
          %v787 = vsel %vm761, %v745, 0
          %v790 = vsel %vm761, %v746, 0
          %v793 = vsel %vm761, %v747, 0
          %v796 = vsel %vm761, %v748, 0
          %v799 = vsel %vm761, %v749, 0
          %v802 = vsel %vm761, %v750, 0
          %v805 = vsel %vm761, %v751, 0
          %v808 = vsel %vm761, %v752, 0
          %810 = vmatprep.subr.mxu0 0.0
          %811 = vmatpush1.msra.mxu0 0.0
          %812 = vmatprep.subr.mxu0 0.0
          %813 = vmatpush1.msra.mxu0 0.0
          %814 = vmatprep.subr.mxu0 0.0
          %815 = vmatpush1.msra.mxu0 0.0
          %816 = vmatprep.subr.mxu0 0.0
          %817 = vmatpush1.msra.mxu0 0.0
          %818 = vmatprep.subr.mxu0 0.0
          %819 = vmatpush1.msra.mxu0 0.0
          %820 = vmatprep.subr.mxu0 0.0
          %821 = vmatpush1.msra.mxu0 0.0
          %822 = vmatprep.subr.mxu0 0.0
          %823 = vmatpush1.msra.mxu0 0.0
          %824 = vmatprep.subr.mxu0 0.0
          %825 = vmatpush1.msra.mxu0 0.0
          %826 = vmatprep.subr.mxu0 0.0
          %827 = vmatpush1.msra.mxu0 %v760
          %828 = vmatprep.subr.mxu0 0.0
          %829 = vmatpush1.msra.mxu0 %v759
          %830 = vmatprep.subr.mxu0 0.0
          %831 = vmatpush1.msra.mxu0 %v758
          %832 = vmatprep.subr.mxu0 0.0
          %833 = vmatpush1.msra.mxu0 %v757
          %834 = vmatprep.subr.mxu0 0.0
          %835 = vmatpush1.msra.mxu0 %v756
          %836 = vmatprep.subr.mxu0 0.0
          %837 = vmatpush1.msra.mxu0 %v755
          %838 = vmatprep.subr.mxu0 0.0
          %839 = vmatpush1.msra.mxu0 %v754
          %840 = vmatprep.subr.mxu0 0.0
          %841 = vmatpush1.msra.mxu0 %v753
          %842 = vmatprep.subr.mxu0 0.0
          %843 = vmatpush2.msra.mxu0 0.0
          %844 = vmatprep.subr.mxu0 0.0
          %845 = vmatpush2.msra.mxu0 0.0
          %846 = vmatprep.subr.mxu0 0.0
          %847 = vmatpush2.msra.mxu0 0.0
          %848 = vmatprep.subr.mxu0 0.0
          %849 = vmatpush2.msra.mxu0 0.0
          %850 = vmatprep.subr.mxu0 0.0
          %851 = vmatpush2.msra.mxu0 0.0
          %852 = vmatprep.subr.mxu0 0.0
          %853 = vmatpush2.msra.mxu0 0.0
          %854 = vmatprep.subr.mxu0 0.0
          %855 = vmatpush2.msra.mxu0 0.0
          %856 = vmatprep.subr.mxu0 0.0
          %857 = vmatpush2.msra.mxu0 0.0
          %858 = vmatprep.subr.mxu0 0.0
          %859 = vmatpush2.msra.mxu0 0.0
          %860 = vmatprep.subr.mxu0 0.0
          %861 = vmatpush2.msra.mxu0 0.0
          %862 = vmatprep.subr.mxu0 0.0
          %863 = vmatpush2.msra.mxu0 0.0
          %864 = vmatprep.subr.mxu0 0.0
          %865 = vmatpush2.msra.mxu0 0.0
          %866 = vmatprep.subr.mxu0 0.0
          %867 = vmatpush2.msra.mxu0 0.0
          %868 = vmatprep.subr.mxu0 0.0
          %869 = vmatpush2.msra.mxu0 0.0
          %870 = vmatprep.subr.mxu0 0.0
          %871 = vmatpush2.msra.mxu0 0.0
          %872 = vmatprep.subr.mxu0 0.0
          %873 = vmatpush2.msra.mxu0 0.0
          %874 = vmatprep.mubr.f32.mxu0 0.0
          %875 = vmatmul.mubr.f32.gmra.mxu0 %v763
          %v876 = vpop.f32.mrf.mxu0
          %v877 = vadd.f32 0.0, %v876
          %v878 = vpop.f32.mrf.mxu0
          %879 = vmatprep.mubr.f32.mxu0 0.0
          %880 = vmatmul.mubr.f32.gmra.mxu0 %v766
          %v881 = vpop.f32.mrf.mxu0
          %v882 = vadd.f32 0.0, %v881
          %v883 = vpop.f32.mrf.mxu0
          %884 = vmatprep.mubr.f32.mxu0 0.0
          %885 = vmatmul.mubr.f32.gmra.mxu0 %v769
          %v886 = vpop.f32.mrf.mxu0
          %v887 = vadd.f32 0.0, %v886
          %v888 = vpop.f32.mrf.mxu0
          %889 = vmatprep.mubr.f32.mxu0 0.0
          %890 = vmatmul.mubr.f32.gmra.mxu0 %v772
          %v891 = vpop.f32.mrf.mxu0
          %v892 = vadd.f32 0.0, %v891
          %v893 = vpop.f32.mrf.mxu0
          %894 = vmatprep.mubr.f32.mxu0 0.0
          %895 = vmatmul.mubr.f32.gmra.mxu0 %v775
          %v896 = vpop.f32.mrf.mxu0
          %v897 = vadd.f32 0.0, %v896
          %v898 = vpop.f32.mrf.mxu0
          %899 = vmatprep.mubr.f32.mxu0 0.0
          %900 = vmatmul.mubr.f32.gmra.mxu0 %v778
          %v901 = vpop.f32.mrf.mxu0
          %v902 = vadd.f32 0.0, %v901
          %v903 = vpop.f32.mrf.mxu0
          %904 = vmatprep.mubr.f32.mxu0 0.0
          %905 = vmatmul.mubr.f32.gmra.mxu0 %v781
          %v906 = vpop.f32.mrf.mxu0
          %v907 = vadd.f32 0.0, %v906
          %v908 = vpop.f32.mrf.mxu0
          %909 = vmatprep.mubr.f32.mxu0 0.0
          %910 = vmatmul.mubr.f32.gmra.mxu0 %v784
          %v911 = vpop.f32.mrf.mxu0
          %v912 = vadd.f32 0.0, %v911
          %v913 = vpop.f32.mrf.mxu0
          %914 = vmatprep.mubr.f32.mxu0 0.0
          %915 = vmatmul.mubr.f32.gmra.mxu0 %v787
          %v916 = vpop.f32.mrf.mxu0
          %v917 = vadd.f32 0.0, %v916
          %v918 = vpop.f32.mrf.mxu0
          %919 = vmatprep.mubr.f32.mxu0 0.0
          %920 = vmatmul.mubr.f32.gmra.mxu0 %v790
          %v921 = vpop.f32.mrf.mxu0
          %v922 = vadd.f32 0.0, %v921
          %v923 = vpop.f32.mrf.mxu0
          %924 = vmatprep.mubr.f32.mxu0 0.0
          %925 = vmatmul.mubr.f32.gmra.mxu0 %v793
          %v926 = vpop.f32.mrf.mxu0
          %v927 = vadd.f32 0.0, %v926
          %v928 = vpop.f32.mrf.mxu0
          %929 = vmatprep.mubr.f32.mxu0 0.0
          %930 = vmatmul.mubr.f32.gmra.mxu0 %v796
          %v931 = vpop.f32.mrf.mxu0
          %v932 = vadd.f32 0.0, %v931
          %v933 = vpop.f32.mrf.mxu0
          %934 = vmatprep.mubr.f32.mxu0 0.0
          %935 = vmatmul.mubr.f32.gmra.mxu0 %v799
          %v936 = vpop.f32.mrf.mxu0
          %v937 = vadd.f32 0.0, %v936
          %v938 = vpop.f32.mrf.mxu0
          %939 = vmatprep.mubr.f32.mxu0 0.0
          %940 = vmatmul.mubr.f32.gmra.mxu0 %v802
          %v941 = vpop.f32.mrf.mxu0
          %v942 = vadd.f32 0.0, %v941
          %v943 = vpop.f32.mrf.mxu0
          %944 = vmatprep.mubr.f32.mxu0 0.0
          %945 = vmatmul.mubr.f32.gmra.mxu0 %v805
          %v946 = vpop.f32.mrf.mxu0
          %v947 = vadd.f32 0.0, %v946
          %v948 = vpop.f32.mrf.mxu0
          %949 = vmatprep.mubr.f32.mxu0 0.0
          %950 = vmatmul.mubr.f32.gmra.mxu0 %v808
          %v951 = vpop.f32.mrf.mxu0
          %v952 = vadd.f32 0.0, %v951
          %v953 = vpop.f32.mrf.mxu0
          %954 = vdwg.mxu0
          %v955 = vld [vmem:[#allocation6] sm:$0x1]
          %v956 = vadd.f32 %v877, %v882
          %v957 = vadd.f32 %v956, %v887
          %v958 = vadd.f32 %v957, %v892
          %v959 = vadd.f32 %v958, %v897
          %v960 = vadd.f32 %v959, %v902
          %v961 = vadd.f32 %v960, %v907
          %v962 = vadd.f32 %v961, %v912
          %v963 = vadd.f32 %v962, %v917
          %v964 = vadd.f32 %v963, %v922
          %v965 = vadd.f32 %v964, %v927
          %v966 = vadd.f32 %v965, %v932
          %v967 = vadd.f32 %v966, %v937
          %v968 = vadd.f32 %v967, %v942
          %v969 = vadd.f32 %v968, %v947
          %v970 = vadd.f32 %v969, %v952
          %v971 = vrot.slane %v970, 4
          %v972 = vadd.f32 %v970, %v971
          %v973 = vrot.slane %v972, 2
          %v974 = vadd.f32 %v972, %v973
          %v975 = vrot.slane %v974, 1
          %v976 = vadd.f32 %v974, %v975
          %v977 = vadd.f32 %v955, %v976
          %978 = vst [vmem:[#allocation6] sm:$0x1] %v977
          %v979 = vld [vmem:[#allocation7] sm:$0x1]
          %v980 = vmul.f32 %v877, %v877
          %v981 = vmul.f32 %v882, %v882
          %v982 = vmul.f32 %v887, %v887
          %v983 = vmul.f32 %v892, %v892
          %v984 = vmul.f32 %v897, %v897
          %v985 = vmul.f32 %v902, %v902
          %v986 = vmul.f32 %v907, %v907
          %v987 = vmul.f32 %v912, %v912
          %v988 = vmul.f32 %v917, %v917
          %v989 = vmul.f32 %v922, %v922
          %v990 = vmul.f32 %v927, %v927
          %v991 = vmul.f32 %v932, %v932
          %v992 = vmul.f32 %v937, %v937
          %v993 = vmul.f32 %v942, %v942
          %v994 = vmul.f32 %v947, %v947
          %v995 = vmul.f32 %v952, %v952
          %v996 = vadd.f32 %v980, %v981
          %v997 = vadd.f32 %v996, %v982
          %v998 = vadd.f32 %v997, %v983
          %v999 = vadd.f32 %v998, %v984
          %v1000 = vadd.f32 %v999, %v985
          %v1001 = vadd.f32 %v1000, %v986
          %v1002 = vadd.f32 %v1001, %v987
          %v1003 = vadd.f32 %v1002, %v988
          %v1004 = vadd.f32 %v1003, %v989
          %v1005 = vadd.f32 %v1004, %v990
          %v1006 = vadd.f32 %v1005, %v991
          %v1007 = vadd.f32 %v1006, %v992
          %v1008 = vadd.f32 %v1007, %v993
          %v1009 = vadd.f32 %v1008, %v994
          %v1010 = vadd.f32 %v1009, %v995
          %v1011 = vrot.slane %v1010, 4
          %v1012 = vadd.f32 %v1010, %v1011
          %v1013 = vrot.slane %v1012, 2
          %v1014 = vadd.f32 %v1012, %v1013
          %v1015 = vrot.slane %v1014, 1
          %v1016 = vadd.f32 %v1014, %v1015
          %v1017 = vadd.f32 %v979, %v1016
          %1018 = vst [vmem:[#allocation7] sm:$0x1] %v1017
          %v1019 = vmax.f32 %v877, %v897
          %v1020 = vmax.f32 %v882, %v902
          %v1021 = vmax.f32 %v887, %v907
          %v1022 = vmax.f32 %v892, %v912
          %v1023 = vmax.f32 %v1019, %v917
          %v1024 = vmax.f32 %v1020, %v922
          %v1025 = vmax.f32 %v1021, %v927
          %v1026 = vmax.f32 %v1022, %v932
          %v1027 = vmax.f32 %v1023, %v937
          %v1028 = vmax.f32 %v1024, %v942
          %v1029 = vmax.f32 %v1025, %v947
          %v1030 = vmax.f32 %v1026, %v952
          %v1031 = vmax.f32 %v1027, %v1028
          %v1032 = vmax.f32 %v1029, %v1030
          %v1033 = vmax.f32 %v1031, %v1032
          %v1034 = vrot.slane %v1033, 4
          %v1035 = vmax.f32 %v1033, %v1034
          %v1036 = vrot.slane %v1035, 2
          %v1037 = vmax.f32 %v1035, %v1036
          %v1038 = vrot.slane %v1037, 1
          %v1039 = vmax.f32 %v1037, %v1038
          %v1040 = vmin.f32 %v877, %v897
          %v1041 = vmin.f32 %v882, %v902
          %v1042 = vmin.f32 %v887, %v907
          %v1043 = vmin.f32 %v892, %v912
          %v1044 = vmin.f32 %v1040, %v917
          %v1045 = vmin.f32 %v1041, %v922
          %v1046 = vmin.f32 %v1042, %v927
          %v1047 = vmin.f32 %v1043, %v932
          %v1048 = vmin.f32 %v1044, %v937
          %v1049 = vmin.f32 %v1045, %v942
          %v1050 = vmin.f32 %v1046, %v947
          %v1051 = vmin.f32 %v1047, %v952
          %v1052 = vmin.f32 %v1048, %v1049
          %v1053 = vmin.f32 %v1050, %v1051
          %v1054 = vmin.f32 %v1052, %v1053
          %v1055 = vrot.slane %v1054, 4
          %v1056 = vmin.f32 %v1054, %v1055
          %v1057 = vrot.slane %v1056, 2
          %v1058 = vmin.f32 %v1056, %v1057
          %v1059 = vrot.slane %v1058, 1
          %v1060 = vmin.f32 %v1058, %v1059
          %v1061 = vlaneseq
          %v1062 = vshrl.u32 %v1061, 7
          %v1063 = vstv %s31
          %vm1064 = vcmp.eq.s32.totalorder %v1062, %v1063
          %v1065 = vld [vmem:[#allocation8] sm:$0x3]
          %v1066 = vmax.f32 %v1065, %v1039
          %v1067 = vsel %vm1064, 1, 0
          %vm1068 = vcmp.eq.s32.totalorder %v1067, 1
          %v1069 = vsel %vm1068, %v1066, %v1065
          %1070 = vst [vmem:[#allocation8] sm:$0x3] %v1069
          %v1071 = vld [vmem:[#allocation9] sm:$0x3]
          %v1072 = vmin.f32 %v1071, %v1060
          %v1073 = vsel %vm1068, %v1072, %v1071
          %1074 = vst [vmem:[#allocation9] sm:$0x3] %v1073
          %p1075 = scmp.eq.s32.totalorder %s31, 1
          %p1076 = scmp.eq.s32.totalorder %s32, 1
          %p1077 = pnand %p1075, %p1076
          %p1078 = pneg %p1077
          // Predicated region
          $region81: #{tpu_custom_call.1} parent=75 // pred_check
            _
          $region82: #{tpu_custom_call.1} parent=75 // pred_check_branch
            %1080 = sbr.rel (%p1077) target = $region84
          $region83: #{tpu_custom_call.1} parent=75 // pred_region
            %v1081 = vld [vmem:[#allocation6] sm:$0x1]
            %v1082 = vmul.f32 %v1081, 0.001953125
            %v1083 = vld [vmem:[#allocation7] sm:$0x1]
            %v1084 = vmul.f32 %v1083, 0.001953125
            %v1085 = vmul.f32 %v1082, %v1082
            %v1086 = vsub.f32 %v1084, %v1085
            %v1087 = vmax.f32 %v1086, 0.0
            %v1088 = vld [vmem:[%s5] sm:$0x1]
            %v1089 = vadd.f32 %v1087, 1e-05
            %v1090 = vrsqrt.pop %v1089
            %v1091 = vmul.f32 %v1088, %v1090
            %v1092 = vld [vmem:[%s6] sm:$0x1]
            %v1093 = vmul.f32 %v1082, %v1091
            %v1094 = vsub.f32 %v1092, %v1093
            %vm1095 = vcmp.ge.f32.partialorder %v1091, 0.0
            %v1096 = vld [vmem:[#allocation8] sm:$0x3]
            %v1097 = vld [vmem:[#allocation9] sm:$0x3]
            %v1098 = vsel %vm1095, 1, 0
            %v1099 = vlaneseq
            %v1100 = vshrl.u32 %v1099, 7
            %v1101 = vsub.s32 0, %v1100
            %v1102 = vrot.slane %v1098, %v1101
            %vm1103 = vcmp.eq.s32.totalorder %v1102, 1
            %v1104 = vsel %vm1103, %v1096, %v1097
            %v1106 = vlaneseq
            %v1107 = vshrl.u32 %v1106, 7
            %v1108 = vsub.s32 0, %v1107
            %v1109 = vrot.slane %v1091, %v1108
            %v1111 = vmul.f32 %v1104, %v1109
            %v1113 = vlaneseq
            %v1114 = vshrl.u32 %v1113, 7
            %v1115 = vsub.s32 0, %v1114
            %v1116 = vrot.slane %v1094, %v1115
            %v1118 = vadd.f32 %v1111, %v1116
            %v1119 = vmax.f32 %v1118, 0.0
            %v1120 = vld [vmem:[#allocation13] sm:$0xff]
            %v1121 = vld [vmem:[#allocation13 + $0x8] sm:$0xff]
            %v1122 = vld [vmem:[#allocation13 + $0x10] sm:$0xff]
            %v1123 = vld [vmem:[#allocation13 + $0x18] sm:$0xff]
            %v1124 = vld [vmem:[#allocation13 + $0x20] sm:$0xff]
            %v1125 = vld [vmem:[#allocation13 + $0x28] sm:$0xff]
            %v1126 = vld [vmem:[#allocation13 + $0x30] sm:$0xff]
            %v1127 = vld [vmem:[#allocation13 + $0x38] sm:$0xff]
            %v1128 = vld [vmem:[#allocation13 + $0x40] sm:$0xff]
            %v1129 = vld [vmem:[#allocation13 + $0x48] sm:$0xff]
            %v1130 = vld [vmem:[#allocation13 + $0x50] sm:$0xff]
            %v1131 = vld [vmem:[#allocation13 + $0x58] sm:$0xff]
            %v1132 = vld [vmem:[#allocation13 + $0x60] sm:$0xff]
            %v1133 = vld [vmem:[#allocation13 + $0x68] sm:$0xff]
            %v1134 = vld [vmem:[#allocation13 + $0x70] sm:$0xff]
            %v1135 = vld [vmem:[#allocation13 + $0x78] sm:$0xff]
            %v1136 = vld [vmem:[%s8] sm:$0x1]
            %v1138 = vlaneseq
            %v1139 = vshrl.u32 %v1138, 7
            %v1140 = vsub.s32 0, %v1139
            %v1141 = vrot.slane %v1136, %v1140
            %1143 = vmatprep.subr.mxu0 0.0
            %1144 = vmatpush1.msra.mxu0 %v1135
            %1145 = vmatprep.subr.mxu0 0.0
            %1146 = vmatpush1.msra.mxu0 %v1134
            %1147 = vmatprep.subr.mxu0 0.0
            %1148 = vmatpush1.msra.mxu0 %v1133
            %1149 = vmatprep.subr.mxu0 0.0
            %1150 = vmatpush1.msra.mxu0 %v1132
            %1151 = vmatprep.subr.mxu0 0.0
            %1152 = vmatpush1.msra.mxu0 %v1131
            %1153 = vmatprep.subr.mxu0 0.0
            %1154 = vmatpush1.msra.mxu0 %v1130
            %1155 = vmatprep.subr.mxu0 0.0
            %1156 = vmatpush1.msra.mxu0 %v1129
            %1157 = vmatprep.subr.mxu0 0.0
            %1158 = vmatpush1.msra.mxu0 %v1128
            %1159 = vmatprep.subr.mxu0 0.0
            %1160 = vmatpush1.msra.mxu0 %v1127
            %1161 = vmatprep.subr.mxu0 0.0
            %1162 = vmatpush1.msra.mxu0 %v1126
            %1163 = vmatprep.subr.mxu0 0.0
            %1164 = vmatpush1.msra.mxu0 %v1125
            %1165 = vmatprep.subr.mxu0 0.0
            %1166 = vmatpush1.msra.mxu0 %v1124
            %1167 = vmatprep.subr.mxu0 0.0
            %1168 = vmatpush1.msra.mxu0 %v1123
            %1169 = vmatprep.subr.mxu0 0.0
            %1170 = vmatpush1.msra.mxu0 %v1122
            %1171 = vmatprep.subr.mxu0 0.0
            %1172 = vmatpush1.msra.mxu0 %v1121
            %1173 = vmatprep.subr.mxu0 0.0
            %1174 = vmatpush1.msra.mxu0 %v1120
            %1175 = vmatprep.subr.mxu0 0.0
            %1176 = vmatpush2.msra.mxu0 0.0
            %1177 = vmatprep.subr.mxu0 0.0
            %1178 = vmatpush2.msra.mxu0 0.0
            %1179 = vmatprep.subr.mxu0 0.0
            %1180 = vmatpush2.msra.mxu0 0.0
            %1181 = vmatprep.subr.mxu0 0.0
            %1182 = vmatpush2.msra.mxu0 0.0
            %1183 = vmatprep.subr.mxu0 0.0
            %1184 = vmatpush2.msra.mxu0 0.0
            %1185 = vmatprep.subr.mxu0 0.0
            %1186 = vmatpush2.msra.mxu0 0.0
            %1187 = vmatprep.subr.mxu0 0.0
            %1188 = vmatpush2.msra.mxu0 0.0
            %1189 = vmatprep.subr.mxu0 0.0
            %1190 = vmatpush2.msra.mxu0 0.0
            %1191 = vmatprep.subr.mxu0 0.0
            %1192 = vmatpush2.msra.mxu0 0.0
            %1193 = vmatprep.subr.mxu0 0.0
            %1194 = vmatpush2.msra.mxu0 0.0
            %1195 = vmatprep.subr.mxu0 0.0
            %1196 = vmatpush2.msra.mxu0 0.0
            %1197 = vmatprep.subr.mxu0 0.0
            %1198 = vmatpush2.msra.mxu0 0.0
            %1199 = vmatprep.subr.mxu0 0.0
            %1200 = vmatpush2.msra.mxu0 0.0
            %1201 = vmatprep.subr.mxu0 0.0
            %1202 = vmatpush2.msra.mxu0 0.0
            %1203 = vmatprep.subr.mxu0 0.0
            %1204 = vmatpush2.msra.mxu0 0.0
            %1205 = vmatprep.subr.mxu0 0.0
            %1206 = vmatpush2.msra.mxu0 0.0
            %1207 = vmatprep.mubr.f32.mxu0 0.0
            %1208 = vmatmul.mubr.f32.gmra.mxu0 %v1119
            %v1209 = vpop.f32.mrf.mxu0
            %v1210 = vadd.f32 %v1141, %v1209
            %v1211 = vpop.f32.mrf.mxu0
            %1212 = vdwg.mxu0
            %1213 = vst [vmem:[#allocation15] sm:$0x3] %v1210
          $region84: #{tpu_custom_call.1} parent=75 // pred_fallthru
            _
        $region76: #{tpu_custom_call.1} parent=55 // pred_fallthru
          _
        // Predicated region
        $region85: #{tpu_custom_call.1} parent=55 // pred_check
          %p1214 = pneg %p253
        $region86: #{tpu_custom_call.1} parent=55 // pred_check_branch
          %1216 = sbr.rel (%p1214) target = $region88
        $region87: #{tpu_custom_call.1} parent=55 // pred_region
          %s1218 = ssub.s32 32, 32
          %1219 = vsyncadd [#allocation12], %s1218
          %s1221 = sshll.u32 [#allocation15], 4
          %s1222 = int_to_ptr.vmem [resolvable:$true] %s1221
          %1224 = dma.vmem_to_hbm [thread:$0]  %s1222, 32, %s9, [#allocation12]
        $region88: #{tpu_custom_call.1} parent=55 // pred_fallthru
          _
        // Predicated region
        $region89: #{tpu_custom_call.1} parent=55 // pred_check
          %p1225 = pneg %p253
        $region90: #{tpu_custom_call.1} parent=55 // pred_check_branch
          %1227 = sbr.rel (%p1225) target = $region92
        $region91: #{tpu_custom_call.1} parent=55 // pred_region
          %1228 = dma.done [#allocation12], 32
        $region92: #{tpu_custom_call.1} parent=55 // pred_fallthru
          _
      $region56: #{tpu_custom_call.1} parent=5 // pred_fallthru
        _
      %p1229 = scmp.le.s32.totalorder 2, %s20
      // Predicated region
      $region93: #{tpu_custom_call.1} parent=5 // pred_check
        %p1230 = pneg %p1229
      $region94: #{tpu_custom_call.1} parent=5 // pred_check_branch
        %1232 = sbr.rel (%p1230) target = $region96
      $region95: #{tpu_custom_call.1} parent=5 // pred_region
        %s1233 = ssub.s32 %s20, 2
      $region96: #{tpu_custom_call.1} parent=5 // pred_fallthru
        _
    $region6: #{tpu_custom_call.1} parent=1 // loop_footer
      %s24 = sadd.s32 1, %s20
    $region7: #{tpu_custom_call.1} parent=1 // loop_footer_branch
      %19 = sbr.rel target = $region3
    $region8: #{tpu_custom_call.1} parent=1 // loop_exit
      _
    %1234 = vsyncpa [#allocation11], 1
    %s1235 = scalar_lea.sflag [#allocation11], 1
    %1236 = vsyncpa %s1235, 1
    %1237 = vsyncpa [#allocation14], 1
    %1238 = vsyncpa [#allocation12], 1
    %s1239 = scalar_lea.sflag [#allocation12], 1
    %1240 = vsyncpa %s1239, 1

</llo_original>
